<compile_context>
chip_gen: v6e
topology: v6e:2x2x1
jax: 0.10.0
libtpu: 0.0.40
codegen_flags: <defaults>
</compile_context>

<pallas_src>
import numpy as np
import jax
import jax.numpy as jnp
from jax.experimental import pallas as pl
from jax.experimental.pallas import tpu as pltpu

_PSTRIDE = 16  # per-unit parameter stride (9 used, padded to 16 for aligned lanes)


def _gabor_kernel(params_ref, gx_ref, gy_ref, xt_ref, bias_ref, out_ref, eff_ref):
    # params_ref: (BT, 16*U) per unit (first 9 lanes used):
    #             [loc_x, loc_y, cx, sx, cy, sy, wc, ws, a_half, 0...]
    #             cx=cos/sig_x  sx=sin/sig_x  cy=cos/sig_y  sy=sin/sig_y
    #             wc=2*pi*f*cos ws=2*pi*f*sin a_half=0.5*output_a
    # gx_ref/gy_ref: (1, S2) flattened base grids (x varies fast in j, y in i)
    # xt_ref:     (S2, TN) bf16 images, pre-transposed (pixels on sublanes)
    # bias_ref:   (BT, 1)  output_b per ensemble
    # out_ref:    (BT, TN) lane-dense output tile
    # eff_ref:    (BT, S2) bf16 VMEM scratch, persistent across the n axis

    @pl.when(pl.program_id(1) == 0)
    def _synthesize():
        num_unit = params_ref.shape[1] // _PSTRIDE
        gx = gx_ref[...]                               # (1, S2)
        gy = gy_ref[...]                               # (1, S2)
        p = params_ref[...]                            # (BT, 16*U)
        eff = None
        for u in range(num_unit):
            c = _PSTRIDE * u
            x_pts = gx - p[:, c + 0:c + 1]             # (BT, S2)
            y_pts = gy - p[:, c + 1:c + 2]             # (BT, S2)
            # x_w = pattern_x/sigma_x ; y_h = pattern_y/sigma_y ; arg = 2*pi*f*pattern_y
            x_w = y_pts * p[:, c + 3:c + 4] + x_pts * p[:, c + 2:c + 3]
            y_h = y_pts * p[:, c + 4:c + 5] - x_pts * p[:, c + 5:c + 6]
            arg = y_pts * p[:, c + 6:c + 7] - x_pts * p[:, c + 7:c + 8]
            g = p[:, c + 8:c + 9] * (jnp.exp(-0.5 * (x_w * x_w + y_h * y_h))
                                     * jnp.cos(arg))
            eff = g if eff is None else eff + g        # (BT, S2) f32
        eff_ref[...] = eff.astype(eff_ref.dtype)       # cast to bf16 once per b-tile

    # Single bf16 MXU contraction with f32 accumulation: (BT,S2) x (S2,TN) -> (BT,TN)
    scores = jax.lax.dot_general(
        eff_ref[...], xt_ref[...],
        dimension_numbers=(((1,), (0,)), ((), ())),
        preferred_element_type=jnp.float32)            # (BT, TN) f32
    out_ref[...] = scores + bias_ref[...]


def _make_flat_basegrids(imsize):
    base = np.linspace(-imsize / 2 + 0.5, imsize / 2 - 0.5, imsize,
                       dtype=np.float32) / np.float32(imsize)
    gx = base          # _basegrid_x
    gy = -base         # _basegrid_y
    # flatten the (i, j) grid row-major: k = i*imsize + j
    gx_flat = np.tile(gx, imsize)[None, :].astype(np.float32)     # varies with j
    gy_flat = np.repeat(gy, imsize)[None, :].astype(np.float32)   # varies with i
    return gx_flat, gy_flat


def _round_up(v, m):
    return ((v + m - 1) // m) * m


def gabor_forward(x, imsize, loc, sigma, orientation, frequency,
                  output_a, output_b, *, bt=256, tn=512):
    """x: (N, 1, imsize, imsize) NCHW.  Returns (B, N) like GaborBase.

    bt: Gabor ensembles per grid step (MXU LHS rows).  Production default 256
        (v6e/v7x MXU pass); use 128 on v5e. Clamped to the padded problem size.
    tn: images per grid step (lane tile, multiple of 128). Production default
        512; keep <=256 on v7x if S2 is large (64 MiB physical VMEM).
    """
    x = jnp.asarray(x, jnp.float32)
    N = x.shape[0]
    S2 = imsize * imsize

    orientation = jnp.asarray(orientation, jnp.float32)
    B, U = orientation.shape
    loc = jnp.asarray(loc, jnp.float32)
    sigma = jnp.asarray(sigma, jnp.float32)
    frequency = jnp.asarray(frequency, jnp.float32)
    output_a = jnp.asarray(output_a, jnp.float32)
    output_b = jnp.asarray(output_b, jnp.float32)

    # Clamp production tiles down for small problems (demo stays small).
    bt = int(min(bt, _round_up(B, 8)))
    tn = int(min(tn, _round_up(N, 128)))
    B_pad = _round_up(B, bt)
    N_pad = _round_up(N, tn)

    # Host/XLA-side derived coefficients (removes divisions, trig, 2*pi and the
    # 0.5 constant from the kernel).
    cos_o = jnp.cos(orientation)
    sin_o = jnp.sin(orientation)
    inv_sx = 1.0 / sigma[0]
    inv_sy = 1.0 / sigma[1]
    w = (2.0 * np.pi) * frequency
    coeffs = jnp.stack([
        loc[0], loc[1],
        cos_o * inv_sx, sin_o * inv_sx,    # cx, sx
        cos_o * inv_sy, sin_o * inv_sy,    # cy, sy
        w * cos_o, w * sin_o,              # wc, ws
        0.5 * output_a,                    # a_half
    ], axis=-1).astype(jnp.float32)        # (B, U, 9)
    coeffs16 = jnp.zeros((B, U, _PSTRIDE), jnp.float32).at[:, :, :9].set(coeffs)

    # Zero-padded rows are harmless: all coefficients 0 -> gabor 0 (no divisions
    # in-kernel, so no NaNs); padded output is cropped below.
    params = jnp.zeros((B_pad, U * _PSTRIDE), jnp.float32).at[:B].set(
        coeffs16.reshape(B, U * _PSTRIDE))
    bias = jnp.zeros((B_pad, 1), jnp.float32).at[:B, 0].set(output_b)

    # NCHW -> (S2, N_pad) bf16: pixels (contraction dim) on sublanes, images on lanes.
    x_t = jnp.zeros((S2, N_pad), jnp.bfloat16).at[:, :N].set(
        x.reshape(N, S2).T.astype(jnp.bfloat16))

    gx_np, gy_np = _make_flat_basegrids(imsize)
    gx = jnp.asarray(gx_np)
    gy = jnp.asarray(gy_np)

    # Explicit scoped-VMEM budget (double-buffered operands + synthesis slabs).
    vmem_budget = (
        2 * S2 * tn * 2                  # x_t, double-buffered, bf16
        + 2 * bt * tn * 4                # out, double-buffered, f32
        + 2 * bt * U * _PSTRIDE * 4      # params
        + 2 * 2 * S2 * 4                 # gx, gy
        + 2 * bt * 4                     # bias
        + bt * S2 * 2                    # eff scratch (bf16)
        + 8 * bt * S2 * 4                # unit-loop f32 temporaries
    )
    vmem_limit = int(min(96 * 1024 * 1024, max(32 * 1024 * 1024, 2 * vmem_budget)))

    grid = (B_pad // bt, N_pad // tn)
    out = pl.pallas_call(
        _gabor_kernel,
        out_shape=jax.ShapeDtypeStruct((B_pad, N_pad), jnp.float32),
        grid_spec=pltpu.PrefetchScalarGridSpec(
            num_scalar_prefetch=0,
            grid=grid,
            in_specs=[
                pl.BlockSpec((bt, U * _PSTRIDE), lambda b, n: (b, 0)),  # params
                pl.BlockSpec((1, S2), lambda b, n: (0, 0)),             # gx
                pl.BlockSpec((1, S2), lambda b, n: (0, 0)),             # gy
                pl.BlockSpec((S2, tn), lambda b, n: (0, n)),            # x (transposed, bf16)
                pl.BlockSpec((bt, 1), lambda b, n: (b, 0)),             # output_b
            ],
            out_specs=pl.BlockSpec((bt, tn), lambda b, n: (b, n)),
            scratch_shapes=[pltpu.VMEM((bt, S2), jnp.bfloat16)],        # eff cache
        ),
        compiler_params=pltpu.CompilerParams(
            dimension_semantics=("parallel", "arbitrary"),
            vmem_limit_bytes=vmem_limit),
    )(params, gx, gy, x_t, bias)
    return out[:B, :N]


def gabor_forward_ref_np(x, imsize, loc, sigma, ori, freq, a, b):
    """Pure-numpy reference mirroring the PyTorch broadcasting exactly."""
    base = np.linspace(-imsize / 2 + 0.5, imsize / 2 - 0.5, imsize,
                       dtype=np.float32) / np.float32(imsize)
    gx, gy = base, -base
    B, U = ori.shape
    N = x.shape[0]
    x_flat = x.reshape(N, imsize * imsize)
    x_pts = gx[None, None, :] - loc[0][:, :, None]            # (B, U, S)
    y_pts = gy[None, None, :] - loc[1][:, :, None]
    cos_o = np.cos(ori)[:, :, None, None]
    sin_o = np.sin(ori)[:, :, None, None]
    y_exp = y_pts[:, :, :, None]
    x_exp = x_pts[:, :, None, :]
    pat_y = y_exp * cos_o - x_exp * sin_o                     # (B, U, S, S)
    pat_x = y_exp * sin_o + x_exp * cos_o
    x_w = pat_x / sigma[0][:, :, None, None]
    y_h = pat_y / sigma[1][:, :, None, None]
    p = np.exp(-0.5 * x_w * x_w + -0.5 * y_h * y_h)
    gabor = p * 0.5 * np.cos(2 * np.pi * freq[:, :, None, None] * pat_y + 0.0)
    gabor2 = gabor.reshape(B, U, imsize * imsize)
    scores = np.einsum('nk,buk->bun', x_flat, gabor2)         # (B, U, N)
    out = (scores * a[:, :, None]).sum(axis=1) + b[:, None]   # (B, N)
    return out.astype(np.float32)


if __name__ == "__main__":
    imsize = 16
    batch_size, num_unit = 2, 8     # Gabor ensemble batch, number of units
    n_images = 16

    key = jax.random.PRNGKey(0)
    x = jax.random.normal(key, (n_images, 1, imsize, imsize), dtype=jnp.float32)

    # deterministic parameter init, mirroring GaborBase.__default_init
    rng = np.random.RandomState(0)
    scale_factor = 0.5
    portion = 30 / (imsize / scale_factor)
    loc = (rng.rand(2, batch_size, num_unit) * portion - portion / 2).astype(np.float32)
    freq = (rng.rand(batch_size, num_unit) * 6 + 2).astype(np.float32)
    ori = (rng.rand(batch_size, num_unit) * np.pi).astype(np.float32)
    s_lo, s_hi = 2 / imsize, 4 / imsize
    sigma = (rng.rand(2, batch_size, num_unit) * (s_hi - s_lo) + s_lo).astype(np.float32)
    output_a = np.ones((batch_size, num_unit), dtype=np.float32)
    output_b = (rng.rand(batch_size) * 0.1).astype(np.float32)

    out = gabor_forward(x, imsize, loc, sigma, ori, freq, output_a, output_b)
    out = jax.block_until_ready(out)

    ref = gabor_forward_ref_np(np.asarray(x), imsize, loc, sigma, ori, freq,
                               output_a, output_b)
    assert out.shape == (batch_size, n_images)
    # Tolerance accounts for the explicit bf16 MXU operands (same accuracy class
    # as the default f32 MXU precision) and the mathematically exact reordering
    # of the unit sum before the matmul.
    np.testing.assert_allclose(np.asarray(out), ref, rtol=2e-2, atol=5e-2)
    print("KERNEL_OK")
</pallas_src>

<mosaic_0001>
module attributes {stable_mosaic.version = 11 : i64} {
  func.func @_gabor_kernel(%arg0: i32, %arg1: i32, %arg2: memref<8x128xf32, #tpu.memory_space<vmem>>, %arg3: memref<1x256xf32, #tpu.memory_space<vmem>>, %arg4: memref<1x256xf32, #tpu.memory_space<vmem>>, %arg5: memref<256x128xbf16, #tpu.memory_space<vmem>>, %arg6: memref<8x1xf32, #tpu.memory_space<vmem>>, %arg7: memref<8x128xf32, #tpu.memory_space<vmem>>, %arg8: memref<8x256xbf16, #tpu.memory_space<vmem>>) attributes {dimension_semantics = [#tpu.dimension_semantics<parallel>, #tpu.dimension_semantics<arbitrary>], iteration_bounds = array<i64: 1, 1>, scalar_prefetch = 0 : i64, scratch_operands = 1 : i64, tpu.core_type = #tpu.core_type<tc>, window_params = [{transform_indices = @transform_0, window_bounds = array<i64: 8, 128>}, {pipeline_mode = #tpu.pipeline_mode<synchronous>, transform_indices = @transform_1, window_bounds = array<i64: 1, 256>}, {pipeline_mode = #tpu.pipeline_mode<synchronous>, transform_indices = @transform_2, window_bounds = array<i64: 1, 256>}, {transform_indices = @transform_3, window_bounds = array<i64: 256, 128>}, {transform_indices = @transform_4, window_bounds = array<i64: 8, 1>}, {transform_indices = @transform_5, window_bounds = array<i64: 8, 128>}]} {
    %c0_i32 = arith.constant 0 : i32
    %0 = arith.cmpi eq, %arg1, %c0_i32 : i32
    %1 = arith.extui %0 : i1 to i32
    %c0_i32_0 = arith.constant 0 : i32
    %2 = arith.cmpi ne, %1, %c0_i32_0 : i32
    scf.if %2 {
      %c0_8 = arith.constant 0 : index
      %c0_9 = arith.constant 0 : index
      %10 = vector.load %arg3[%c0_8, %c0_9] : memref<1x256xf32, #tpu.memory_space<vmem>>, vector<1x256xf32>
      %c0_10 = arith.constant 0 : index
      %c0_11 = arith.constant 0 : index
      %11 = vector.load %arg4[%c0_10, %c0_11] : memref<1x256xf32, #tpu.memory_space<vmem>>, vector<1x256xf32>
      %c0_12 = arith.constant 0 : index
      %c0_13 = arith.constant 0 : index
      %12 = vector.load %arg2[%c0_12, %c0_13] : memref<8x128xf32, #tpu.memory_space<vmem>>, vector<8x128xf32>
      %13 = vector.extract_strided_slice %12 {offsets = [0, 0], sizes = [8, 1], strides = [1, 1]} : vector<8x128xf32> to vector<8x1xf32>
      %14 = vector.broadcast %10 : vector<1x256xf32> to vector<8x256xf32>
      %15 = vector.broadcast %13 : vector<8x1xf32> to vector<8x256xf32>
      %16 = arith.subf %14, %15 : vector<8x256xf32>
      %17 = vector.extract_strided_slice %12 {offsets = [0, 1], sizes = [8, 1], strides = [1, 1]} : vector<8x128xf32> to vector<8x1xf32>
      %18 = vector.broadcast %11 : vector<1x256xf32> to vector<8x256xf32>
      %19 = vector.broadcast %17 : vector<8x1xf32> to vector<8x256xf32>
      %20 = arith.subf %18, %19 : vector<8x256xf32>
      %21 = vector.extract_strided_slice %12 {offsets = [0, 3], sizes = [8, 1], strides = [1, 1]} : vector<8x128xf32> to vector<8x1xf32>
      %22 = vector.broadcast %21 : vector<8x1xf32> to vector<8x256xf32>
      %23 = arith.mulf %20, %22 : vector<8x256xf32>
      %24 = vector.extract_strided_slice %12 {offsets = [0, 2], sizes = [8, 1], strides = [1, 1]} : vector<8x128xf32> to vector<8x1xf32>
      %25 = vector.broadcast %24 : vector<8x1xf32> to vector<8x256xf32>
      %26 = arith.mulf %16, %25 : vector<8x256xf32>
      %27 = arith.addf %23, %26 : vector<8x256xf32>
      %28 = vector.extract_strided_slice %12 {offsets = [0, 4], sizes = [8, 1], strides = [1, 1]} : vector<8x128xf32> to vector<8x1xf32>
      %29 = vector.broadcast %28 : vector<8x1xf32> to vector<8x256xf32>
      %30 = arith.mulf %20, %29 : vector<8x256xf32>
      %31 = vector.extract_strided_slice %12 {offsets = [0, 5], sizes = [8, 1], strides = [1, 1]} : vector<8x128xf32> to vector<8x1xf32>
      %32 = vector.broadcast %31 : vector<8x1xf32> to vector<8x256xf32>
      %33 = arith.mulf %16, %32 : vector<8x256xf32>
      %34 = arith.subf %30, %33 : vector<8x256xf32>
      %35 = vector.extract_strided_slice %12 {offsets = [0, 6], sizes = [8, 1], strides = [1, 1]} : vector<8x128xf32> to vector<8x1xf32>
      %36 = vector.broadcast %35 : vector<8x1xf32> to vector<8x256xf32>
      %37 = arith.mulf %20, %36 : vector<8x256xf32>
      %38 = vector.extract_strided_slice %12 {offsets = [0, 7], sizes = [8, 1], strides = [1, 1]} : vector<8x128xf32> to vector<8x1xf32>
      %39 = vector.broadcast %38 : vector<8x1xf32> to vector<8x256xf32>
      %40 = arith.mulf %16, %39 : vector<8x256xf32>
      %41 = arith.subf %37, %40 : vector<8x256xf32>
      %42 = vector.extract_strided_slice %12 {offsets = [0, 8], sizes = [8, 1], strides = [1, 1]} : vector<8x128xf32> to vector<8x1xf32>
      %43 = arith.mulf %27, %27 : vector<8x256xf32>
      %44 = arith.mulf %34, %34 : vector<8x256xf32>
      %45 = arith.addf %43, %44 : vector<8x256xf32>
      %cst_14 = arith.constant -5.000000e-01 : f32
      %46 = vector.broadcast %cst_14 : f32 to vector<8x256xf32>
      %47 = arith.mulf %46, %45 : vector<8x256xf32>
      %48 = math.exp %47 : vector<8x256xf32>
      %49 = math.cos %41 : vector<8x256xf32>
      %50 = arith.mulf %48, %49 : vector<8x256xf32>
      %51 = vector.broadcast %42 : vector<8x1xf32> to vector<8x256xf32>
      %52 = arith.mulf %51, %50 : vector<8x256xf32>
      %53 = vector.extract_strided_slice %12 {offsets = [0, 16], sizes = [8, 1], strides = [1, 1]} : vector<8x128xf32> to vector<8x1xf32>
      %54 = vector.broadcast %10 : vector<1x256xf32> to vector<8x256xf32>
      %55 = vector.broadcast %53 : vector<8x1xf32> to vector<8x256xf32>
      %56 = arith.subf %54, %55 : vector<8x256xf32>
      %57 = vector.extract_strided_slice %12 {offsets = [0, 17], sizes = [8, 1], strides = [1, 1]} : vector<8x128xf32> to vector<8x1xf32>
      %58 = vector.broadcast %11 : vector<1x256xf32> to vector<8x256xf32>
      %59 = vector.broadcast %57 : vector<8x1xf32> to vector<8x256xf32>
      %60 = arith.subf %58, %59 : vector<8x256xf32>
      %61 = vector.extract_strided_slice %12 {offsets = [0, 19], sizes = [8, 1], strides = [1, 1]} : vector<8x128xf32> to vector<8x1xf32>
      %62 = vector.broadcast %61 : vector<8x1xf32> to vector<8x256xf32>
      %63 = arith.mulf %60, %62 : vector<8x256xf32>
      %64 = vector.extract_strided_slice %12 {offsets = [0, 18], sizes = [8, 1], strides = [1, 1]} : vector<8x128xf32> to vector<8x1xf32>
      %65 = vector.broadcast %64 : vector<8x1xf32> to vector<8x256xf32>
      %66 = arith.mulf %56, %65 : vector<8x256xf32>
      %67 = arith.addf %63, %66 : vector<8x256xf32>
      %68 = vector.extract_strided_slice %12 {offsets = [0, 20], sizes = [8, 1], strides = [1, 1]} : vector<8x128xf32> to vector<8x1xf32>
      %69 = vector.broadcast %68 : vector<8x1xf32> to vector<8x256xf32>
      %70 = arith.mulf %60, %69 : vector<8x256xf32>
      %71 = vector.extract_strided_slice %12 {offsets = [0, 21], sizes = [8, 1], strides = [1, 1]} : vector<8x128xf32> to vector<8x1xf32>
      %72 = vector.broadcast %71 : vector<8x1xf32> to vector<8x256xf32>
      %73 = arith.mulf %56, %72 : vector<8x256xf32>
      %74 = arith.subf %70, %73 : vector<8x256xf32>
      %75 = vector.extract_strided_slice %12 {offsets = [0, 22], sizes = [8, 1], strides = [1, 1]} : vector<8x128xf32> to vector<8x1xf32>
      %76 = vector.broadcast %75 : vector<8x1xf32> to vector<8x256xf32>
      %77 = arith.mulf %60, %76 : vector<8x256xf32>
      %78 = vector.extract_strided_slice %12 {offsets = [0, 23], sizes = [8, 1], strides = [1, 1]} : vector<8x128xf32> to vector<8x1xf32>
      %79 = vector.broadcast %78 : vector<8x1xf32> to vector<8x256xf32>
      %80 = arith.mulf %56, %79 : vector<8x256xf32>
      %81 = arith.subf %77, %80 : vector<8x256xf32>
      %82 = vector.extract_strided_slice %12 {offsets = [0, 24], sizes = [8, 1], strides = [1, 1]} : vector<8x128xf32> to vector<8x1xf32>
      %83 = arith.mulf %67, %67 : vector<8x256xf32>
      %84 = arith.mulf %74, %74 : vector<8x256xf32>
      %85 = arith.addf %83, %84 : vector<8x256xf32>
      %cst_15 = arith.constant -5.000000e-01 : f32
      %86 = vector.broadcast %cst_15 : f32 to vector<8x256xf32>
      %87 = arith.mulf %86, %85 : vector<8x256xf32>
      %88 = math.exp %87 : vector<8x256xf32>
      %89 = math.cos %81 : vector<8x256xf32>
      %90 = arith.mulf %88, %89 : vector<8x256xf32>
      %91 = vector.broadcast %82 : vector<8x1xf32> to vector<8x256xf32>
      %92 = arith.mulf %91, %90 : vector<8x256xf32>
      %93 = arith.addf %52, %92 : vector<8x256xf32>
      %94 = vector.extract_strided_slice %12 {offsets = [0, 32], sizes = [8, 1], strides = [1, 1]} : vector<8x128xf32> to vector<8x1xf32>
      %95 = vector.broadcast %10 : vector<1x256xf32> to vector<8x256xf32>
      %96 = vector.broadcast %94 : vector<8x1xf32> to vector<8x256xf32>
      %97 = arith.subf %95, %96 : vector<8x256xf32>
      %98 = vector.extract_strided_slice %12 {offsets = [0, 33], sizes = [8, 1], strides = [1, 1]} : vector<8x128xf32> to vector<8x1xf32>
      %99 = vector.broadcast %11 : vector<1x256xf32> to vector<8x256xf32>
      %100 = vector.broadcast %98 : vector<8x1xf32> to vector<8x256xf32>
      %101 = arith.subf %99, %100 : vector<8x256xf32>
      %102 = vector.extract_strided_slice %12 {offsets = [0, 35], sizes = [8, 1], strides = [1, 1]} : vector<8x128xf32> to vector<8x1xf32>
      %103 = vector.broadcast %102 : vector<8x1xf32> to vector<8x256xf32>
      %104 = arith.mulf %101, %103 : vector<8x256xf32>
      %105 = vector.extract_strided_slice %12 {offsets = [0, 34], sizes = [8, 1], strides = [1, 1]} : vector<8x128xf32> to vector<8x1xf32>
      %106 = vector.broadcast %105 : vector<8x1xf32> to vector<8x256xf32>
      %107 = arith.mulf %97, %106 : vector<8x256xf32>
      %108 = arith.addf %104, %107 : vector<8x256xf32>
      %109 = vector.extract_strided_slice %12 {offsets = [0, 36], sizes = [8, 1], strides = [1, 1]} : vector<8x128xf32> to vector<8x1xf32>
      %110 = vector.broadcast %109 : vector<8x1xf32> to vector<8x256xf32>
      %111 = arith.mulf %101, %110 : vector<8x256xf32>
      %112 = vector.extract_strided_slice %12 {offsets = [0, 37], sizes = [8, 1], strides = [1, 1]} : vector<8x128xf32> to vector<8x1xf32>
      %113 = vector.broadcast %112 : vector<8x1xf32> to vector<8x256xf32>
      %114 = arith.mulf %97, %113 : vector<8x256xf32>
      %115 = arith.subf %111, %114 : vector<8x256xf32>
      %116 = vector.extract_strided_slice %12 {offsets = [0, 38], sizes = [8, 1], strides = [1, 1]} : vector<8x128xf32> to vector<8x1xf32>
      %117 = vector.broadcast %116 : vector<8x1xf32> to vector<8x256xf32>
      %118 = arith.mulf %101, %117 : vector<8x256xf32>
      %119 = vector.extract_strided_slice %12 {offsets = [0, 39], sizes = [8, 1], strides = [1, 1]} : vector<8x128xf32> to vector<8x1xf32>
      %120 = vector.broadcast %119 : vector<8x1xf32> to vector<8x256xf32>
      %121 = arith.mulf %97, %120 : vector<8x256xf32>
      %122 = arith.subf %118, %121 : vector<8x256xf32>
      %123 = vector.extract_strided_slice %12 {offsets = [0, 40], sizes = [8, 1], strides = [1, 1]} : vector<8x128xf32> to vector<8x1xf32>
      %124 = arith.mulf %108, %108 : vector<8x256xf32>
      %125 = arith.mulf %115, %115 : vector<8x256xf32>
      %126 = arith.addf %124, %125 : vector<8x256xf32>
      %cst_16 = arith.constant -5.000000e-01 : f32
      %127 = vector.broadcast %cst_16 : f32 to vector<8x256xf32>
      %128 = arith.mulf %127, %126 : vector<8x256xf32>
      %129 = math.exp %128 : vector<8x256xf32>
      %130 = math.cos %122 : vector<8x256xf32>
      %131 = arith.mulf %129, %130 : vector<8x256xf32>
      %132 = vector.broadcast %123 : vector<8x1xf32> to vector<8x256xf32>
      %133 = arith.mulf %132, %131 : vector<8x256xf32>
      %134 = arith.addf %93, %133 : vector<8x256xf32>
      %135 = vector.extract_strided_slice %12 {offsets = [0, 48], sizes = [8, 1], strides = [1, 1]} : vector<8x128xf32> to vector<8x1xf32>
      %136 = vector.broadcast %10 : vector<1x256xf32> to vector<8x256xf32>
      %137 = vector.broadcast %135 : vector<8x1xf32> to vector<8x256xf32>
      %138 = arith.subf %136, %137 : vector<8x256xf32>
      %139 = vector.extract_strided_slice %12 {offsets = [0, 49], sizes = [8, 1], strides = [1, 1]} : vector<8x128xf32> to vector<8x1xf32>
      %140 = vector.broadcast %11 : vector<1x256xf32> to vector<8x256xf32>
      %141 = vector.broadcast %139 : vector<8x1xf32> to vector<8x256xf32>
      %142 = arith.subf %140, %141 : vector<8x256xf32>
      %143 = vector.extract_strided_slice %12 {offsets = [0, 51], sizes = [8, 1], strides = [1, 1]} : vector<8x128xf32> to vector<8x1xf32>
      %144 = vector.broadcast %143 : vector<8x1xf32> to vector<8x256xf32>
      %145 = arith.mulf %142, %144 : vector<8x256xf32>
      %146 = vector.extract_strided_slice %12 {offsets = [0, 50], sizes = [8, 1], strides = [1, 1]} : vector<8x128xf32> to vector<8x1xf32>
      %147 = vector.broadcast %146 : vector<8x1xf32> to vector<8x256xf32>
      %148 = arith.mulf %138, %147 : vector<8x256xf32>
      %149 = arith.addf %145, %148 : vector<8x256xf32>
      %150 = vector.extract_strided_slice %12 {offsets = [0, 52], sizes = [8, 1], strides = [1, 1]} : vector<8x128xf32> to vector<8x1xf32>
      %151 = vector.broadcast %150 : vector<8x1xf32> to vector<8x256xf32>
      %152 = arith.mulf %142, %151 : vector<8x256xf32>
      %153 = vector.extract_strided_slice %12 {offsets = [0, 53], sizes = [8, 1], strides = [1, 1]} : vector<8x128xf32> to vector<8x1xf32>
      %154 = vector.broadcast %153 : vector<8x1xf32> to vector<8x256xf32>
      %155 = arith.mulf %138, %154 : vector<8x256xf32>
      %156 = arith.subf %152, %155 : vector<8x256xf32>
      %157 = vector.extract_strided_slice %12 {offsets = [0, 54], sizes = [8, 1], strides = [1, 1]} : vector<8x128xf32> to vector<8x1xf32>
      %158 = vector.broadcast %157 : vector<8x1xf32> to vector<8x256xf32>
      %159 = arith.mulf %142, %158 : vector<8x256xf32>
      %160 = vector.extract_strided_slice %12 {offsets = [0, 55], sizes = [8, 1], strides = [1, 1]} : vector<8x128xf32> to vector<8x1xf32>
      %161 = vector.broadcast %160 : vector<8x1xf32> to vector<8x256xf32>
      %162 = arith.mulf %138, %161 : vector<8x256xf32>
      %163 = arith.subf %159, %162 : vector<8x256xf32>
      %164 = vector.extract_strided_slice %12 {offsets = [0, 56], sizes = [8, 1], strides = [1, 1]} : vector<8x128xf32> to vector<8x1xf32>
      %165 = arith.mulf %149, %149 : vector<8x256xf32>
      %166 = arith.mulf %156, %156 : vector<8x256xf32>
      %167 = arith.addf %165, %166 : vector<8x256xf32>
      %cst_17 = arith.constant -5.000000e-01 : f32
      %168 = vector.broadcast %cst_17 : f32 to vector<8x256xf32>
      %169 = arith.mulf %168, %167 : vector<8x256xf32>
      %170 = math.exp %169 : vector<8x256xf32>
      %171 = math.cos %163 : vector<8x256xf32>
      %172 = arith.mulf %170, %171 : vector<8x256xf32>
      %173 = vector.broadcast %164 : vector<8x1xf32> to vector<8x256xf32>
      %174 = arith.mulf %173, %172 : vector<8x256xf32>
      %175 = arith.addf %134, %174 : vector<8x256xf32>
      %176 = vector.extract_strided_slice %12 {offsets = [0, 64], sizes = [8, 1], strides = [1, 1]} : vector<8x128xf32> to vector<8x1xf32>
      %177 = vector.broadcast %10 : vector<1x256xf32> to vector<8x256xf32>
      %178 = vector.broadcast %176 : vector<8x1xf32> to vector<8x256xf32>
      %179 = arith.subf %177, %178 : vector<8x256xf32>
      %180 = vector.extract_strided_slice %12 {offsets = [0, 65], sizes = [8, 1], strides = [1, 1]} : vector<8x128xf32> to vector<8x1xf32>
      %181 = vector.broadcast %11 : vector<1x256xf32> to vector<8x256xf32>
      %182 = vector.broadcast %180 : vector<8x1xf32> to vector<8x256xf32>
      %183 = arith.subf %181, %182 : vector<8x256xf32>
      %184 = vector.extract_strided_slice %12 {offsets = [0, 67], sizes = [8, 1], strides = [1, 1]} : vector<8x128xf32> to vector<8x1xf32>
      %185 = vector.broadcast %184 : vector<8x1xf32> to vector<8x256xf32>
      %186 = arith.mulf %183, %185 : vector<8x256xf32>
      %187 = vector.extract_strided_slice %12 {offsets = [0, 66], sizes = [8, 1], strides = [1, 1]} : vector<8x128xf32> to vector<8x1xf32>
      %188 = vector.broadcast %187 : vector<8x1xf32> to vector<8x256xf32>
      %189 = arith.mulf %179, %188 : vector<8x256xf32>
      %190 = arith.addf %186, %189 : vector<8x256xf32>
      %191 = vector.extract_strided_slice %12 {offsets = [0, 68], sizes = [8, 1], strides = [1, 1]} : vector<8x128xf32> to vector<8x1xf32>
      %192 = vector.broadcast %191 : vector<8x1xf32> to vector<8x256xf32>
      %193 = arith.mulf %183, %192 : vector<8x256xf32>
      %194 = vector.extract_strided_slice %12 {offsets = [0, 69], sizes = [8, 1], strides = [1, 1]} : vector<8x128xf32> to vector<8x1xf32>
      %195 = vector.broadcast %194 : vector<8x1xf32> to vector<8x256xf32>
      %196 = arith.mulf %179, %195 : vector<8x256xf32>
      %197 = arith.subf %193, %196 : vector<8x256xf32>
      %198 = vector.extract_strided_slice %12 {offsets = [0, 70], sizes = [8, 1], strides = [1, 1]} : vector<8x128xf32> to vector<8x1xf32>
      %199 = vector.broadcast %198 : vector<8x1xf32> to vector<8x256xf32>
      %200 = arith.mulf %183, %199 : vector<8x256xf32>
      %201 = vector.extract_strided_slice %12 {offsets = [0, 71], sizes = [8, 1], strides = [1, 1]} : vector<8x128xf32> to vector<8x1xf32>
      %202 = vector.broadcast %201 : vector<8x1xf32> to vector<8x256xf32>
      %203 = arith.mulf %179, %202 : vector<8x256xf32>
      %204 = arith.subf %200, %203 : vector<8x256xf32>
      %205 = vector.extract_strided_slice %12 {offsets = [0, 72], sizes = [8, 1], strides = [1, 1]} : vector<8x128xf32> to vector<8x1xf32>
      %206 = arith.mulf %190, %190 : vector<8x256xf32>
      %207 = arith.mulf %197, %197 : vector<8x256xf32>
      %208 = arith.addf %206, %207 : vector<8x256xf32>
      %cst_18 = arith.constant -5.000000e-01 : f32
      %209 = vector.broadcast %cst_18 : f32 to vector<8x256xf32>
      %210 = arith.mulf %209, %208 : vector<8x256xf32>
      %211 = math.exp %210 : vector<8x256xf32>
      %212 = math.cos %204 : vector<8x256xf32>
      %213 = arith.mulf %211, %212 : vector<8x256xf32>
      %214 = vector.broadcast %205 : vector<8x1xf32> to vector<8x256xf32>
      %215 = arith.mulf %214, %213 : vector<8x256xf32>
      %216 = arith.addf %175, %215 : vector<8x256xf32>
      %217 = vector.extract_strided_slice %12 {offsets = [0, 80], sizes = [8, 1], strides = [1, 1]} : vector<8x128xf32> to vector<8x1xf32>
      %218 = vector.broadcast %10 : vector<1x256xf32> to vector<8x256xf32>
      %219 = vector.broadcast %217 : vector<8x1xf32> to vector<8x256xf32>
      %220 = arith.subf %218, %219 : vector<8x256xf32>
      %221 = vector.extract_strided_slice %12 {offsets = [0, 81], sizes = [8, 1], strides = [1, 1]} : vector<8x128xf32> to vector<8x1xf32>
      %222 = vector.broadcast %11 : vector<1x256xf32> to vector<8x256xf32>
      %223 = vector.broadcast %221 : vector<8x1xf32> to vector<8x256xf32>
      %224 = arith.subf %222, %223 : vector<8x256xf32>
      %225 = vector.extract_strided_slice %12 {offsets = [0, 83], sizes = [8, 1], strides = [1, 1]} : vector<8x128xf32> to vector<8x1xf32>
      %226 = vector.broadcast %225 : vector<8x1xf32> to vector<8x256xf32>
      %227 = arith.mulf %224, %226 : vector<8x256xf32>
      %228 = vector.extract_strided_slice %12 {offsets = [0, 82], sizes = [8, 1], strides = [1, 1]} : vector<8x128xf32> to vector<8x1xf32>
      %229 = vector.broadcast %228 : vector<8x1xf32> to vector<8x256xf32>
      %230 = arith.mulf %220, %229 : vector<8x256xf32>
      %231 = arith.addf %227, %230 : vector<8x256xf32>
      %232 = vector.extract_strided_slice %12 {offsets = [0, 84], sizes = [8, 1], strides = [1, 1]} : vector<8x128xf32> to vector<8x1xf32>
      %233 = vector.broadcast %232 : vector<8x1xf32> to vector<8x256xf32>
      %234 = arith.mulf %224, %233 : vector<8x256xf32>
      %235 = vector.extract_strided_slice %12 {offsets = [0, 85], sizes = [8, 1], strides = [1, 1]} : vector<8x128xf32> to vector<8x1xf32>
      %236 = vector.broadcast %235 : vector<8x1xf32> to vector<8x256xf32>
      %237 = arith.mulf %220, %236 : vector<8x256xf32>
      %238 = arith.subf %234, %237 : vector<8x256xf32>
      %239 = vector.extract_strided_slice %12 {offsets = [0, 86], sizes = [8, 1], strides = [1, 1]} : vector<8x128xf32> to vector<8x1xf32>
      %240 = vector.broadcast %239 : vector<8x1xf32> to vector<8x256xf32>
      %241 = arith.mulf %224, %240 : vector<8x256xf32>
      %242 = vector.extract_strided_slice %12 {offsets = [0, 87], sizes = [8, 1], strides = [1, 1]} : vector<8x128xf32> to vector<8x1xf32>
      %243 = vector.broadcast %242 : vector<8x1xf32> to vector<8x256xf32>
      %244 = arith.mulf %220, %243 : vector<8x256xf32>
      %245 = arith.subf %241, %244 : vector<8x256xf32>
      %246 = vector.extract_strided_slice %12 {offsets = [0, 88], sizes = [8, 1], strides = [1, 1]} : vector<8x128xf32> to vector<8x1xf32>
      %247 = arith.mulf %231, %231 : vector<8x256xf32>
      %248 = arith.mulf %238, %238 : vector<8x256xf32>
      %249 = arith.addf %247, %248 : vector<8x256xf32>
      %cst_19 = arith.constant -5.000000e-01 : f32
      %250 = vector.broadcast %cst_19 : f32 to vector<8x256xf32>
      %251 = arith.mulf %250, %249 : vector<8x256xf32>
      %252 = math.exp %251 : vector<8x256xf32>
      %253 = math.cos %245 : vector<8x256xf32>
      %254 = arith.mulf %252, %253 : vector<8x256xf32>
      %255 = vector.broadcast %246 : vector<8x1xf32> to vector<8x256xf32>
      %256 = arith.mulf %255, %254 : vector<8x256xf32>
      %257 = arith.addf %216, %256 : vector<8x256xf32>
      %258 = vector.extract_strided_slice %12 {offsets = [0, 96], sizes = [8, 1], strides = [1, 1]} : vector<8x128xf32> to vector<8x1xf32>
      %259 = vector.broadcast %10 : vector<1x256xf32> to vector<8x256xf32>
      %260 = vector.broadcast %258 : vector<8x1xf32> to vector<8x256xf32>
      %261 = arith.subf %259, %260 : vector<8x256xf32>
      %262 = vector.extract_strided_slice %12 {offsets = [0, 97], sizes = [8, 1], strides = [1, 1]} : vector<8x128xf32> to vector<8x1xf32>
      %263 = vector.broadcast %11 : vector<1x256xf32> to vector<8x256xf32>
      %264 = vector.broadcast %262 : vector<8x1xf32> to vector<8x256xf32>
      %265 = arith.subf %263, %264 : vector<8x256xf32>
      %266 = vector.extract_strided_slice %12 {offsets = [0, 99], sizes = [8, 1], strides = [1, 1]} : vector<8x128xf32> to vector<8x1xf32>
      %267 = vector.broadcast %266 : vector<8x1xf32> to vector<8x256xf32>
      %268 = arith.mulf %265, %267 : vector<8x256xf32>
      %269 = vector.extract_strided_slice %12 {offsets = [0, 98], sizes = [8, 1], strides = [1, 1]} : vector<8x128xf32> to vector<8x1xf32>
      %270 = vector.broadcast %269 : vector<8x1xf32> to vector<8x256xf32>
      %271 = arith.mulf %261, %270 : vector<8x256xf32>
      %272 = arith.addf %268, %271 : vector<8x256xf32>
      %273 = vector.extract_strided_slice %12 {offsets = [0, 100], sizes = [8, 1], strides = [1, 1]} : vector<8x128xf32> to vector<8x1xf32>
      %274 = vector.broadcast %273 : vector<8x1xf32> to vector<8x256xf32>
      %275 = arith.mulf %265, %274 : vector<8x256xf32>
      %276 = vector.extract_strided_slice %12 {offsets = [0, 101], sizes = [8, 1], strides = [1, 1]} : vector<8x128xf32> to vector<8x1xf32>
      %277 = vector.broadcast %276 : vector<8x1xf32> to vector<8x256xf32>
      %278 = arith.mulf %261, %277 : vector<8x256xf32>
      %279 = arith.subf %275, %278 : vector<8x256xf32>
      %280 = vector.extract_strided_slice %12 {offsets = [0, 102], sizes = [8, 1], strides = [1, 1]} : vector<8x128xf32> to vector<8x1xf32>
      %281 = vector.broadcast %280 : vector<8x1xf32> to vector<8x256xf32>
      %282 = arith.mulf %265, %281 : vector<8x256xf32>
      %283 = vector.extract_strided_slice %12 {offsets = [0, 103], sizes = [8, 1], strides = [1, 1]} : vector<8x128xf32> to vector<8x1xf32>
      %284 = vector.broadcast %283 : vector<8x1xf32> to vector<8x256xf32>
      %285 = arith.mulf %261, %284 : vector<8x256xf32>
      %286 = arith.subf %282, %285 : vector<8x256xf32>
      %287 = vector.extract_strided_slice %12 {offsets = [0, 104], sizes = [8, 1], strides = [1, 1]} : vector<8x128xf32> to vector<8x1xf32>
      %288 = arith.mulf %272, %272 : vector<8x256xf32>
      %289 = arith.mulf %279, %279 : vector<8x256xf32>
      %290 = arith.addf %288, %289 : vector<8x256xf32>
      %cst_20 = arith.constant -5.000000e-01 : f32
      %291 = vector.broadcast %cst_20 : f32 to vector<8x256xf32>
      %292 = arith.mulf %291, %290 : vector<8x256xf32>
      %293 = math.exp %292 : vector<8x256xf32>
      %294 = math.cos %286 : vector<8x256xf32>
      %295 = arith.mulf %293, %294 : vector<8x256xf32>
      %296 = vector.broadcast %287 : vector<8x1xf32> to vector<8x256xf32>
      %297 = arith.mulf %296, %295 : vector<8x256xf32>
      %298 = arith.addf %257, %297 : vector<8x256xf32>
      %299 = vector.extract_strided_slice %12 {offsets = [0, 112], sizes = [8, 1], strides = [1, 1]} : vector<8x128xf32> to vector<8x1xf32>
      %300 = vector.broadcast %10 : vector<1x256xf32> to vector<8x256xf32>
      %301 = vector.broadcast %299 : vector<8x1xf32> to vector<8x256xf32>
      %302 = arith.subf %300, %301 : vector<8x256xf32>
      %303 = vector.extract_strided_slice %12 {offsets = [0, 113], sizes = [8, 1], strides = [1, 1]} : vector<8x128xf32> to vector<8x1xf32>
      %304 = vector.broadcast %11 : vector<1x256xf32> to vector<8x256xf32>
      %305 = vector.broadcast %303 : vector<8x1xf32> to vector<8x256xf32>
      %306 = arith.subf %304, %305 : vector<8x256xf32>
      %307 = vector.extract_strided_slice %12 {offsets = [0, 115], sizes = [8, 1], strides = [1, 1]} : vector<8x128xf32> to vector<8x1xf32>
      %308 = vector.broadcast %307 : vector<8x1xf32> to vector<8x256xf32>
      %309 = arith.mulf %306, %308 : vector<8x256xf32>
      %310 = vector.extract_strided_slice %12 {offsets = [0, 114], sizes = [8, 1], strides = [1, 1]} : vector<8x128xf32> to vector<8x1xf32>
      %311 = vector.broadcast %310 : vector<8x1xf32> to vector<8x256xf32>
      %312 = arith.mulf %302, %311 : vector<8x256xf32>
      %313 = arith.addf %309, %312 : vector<8x256xf32>
      %314 = vector.extract_strided_slice %12 {offsets = [0, 116], sizes = [8, 1], strides = [1, 1]} : vector<8x128xf32> to vector<8x1xf32>
      %315 = vector.broadcast %314 : vector<8x1xf32> to vector<8x256xf32>
      %316 = arith.mulf %306, %315 : vector<8x256xf32>
      %317 = vector.extract_strided_slice %12 {offsets = [0, 117], sizes = [8, 1], strides = [1, 1]} : vector<8x128xf32> to vector<8x1xf32>
      %318 = vector.broadcast %317 : vector<8x1xf32> to vector<8x256xf32>
      %319 = arith.mulf %302, %318 : vector<8x256xf32>
      %320 = arith.subf %316, %319 : vector<8x256xf32>
      %321 = vector.extract_strided_slice %12 {offsets = [0, 118], sizes = [8, 1], strides = [1, 1]} : vector<8x128xf32> to vector<8x1xf32>
      %322 = vector.broadcast %321 : vector<8x1xf32> to vector<8x256xf32>
      %323 = arith.mulf %306, %322 : vector<8x256xf32>
      %324 = vector.extract_strided_slice %12 {offsets = [0, 119], sizes = [8, 1], strides = [1, 1]} : vector<8x128xf32> to vector<8x1xf32>
      %325 = vector.broadcast %324 : vector<8x1xf32> to vector<8x256xf32>
      %326 = arith.mulf %302, %325 : vector<8x256xf32>
      %327 = arith.subf %323, %326 : vector<8x256xf32>
      %328 = vector.extract_strided_slice %12 {offsets = [0, 120], sizes = [8, 1], strides = [1, 1]} : vector<8x128xf32> to vector<8x1xf32>
      %329 = arith.mulf %313, %313 : vector<8x256xf32>
      %330 = arith.mulf %320, %320 : vector<8x256xf32>
      %331 = arith.addf %329, %330 : vector<8x256xf32>
      %cst_21 = arith.constant -5.000000e-01 : f32
      %332 = vector.broadcast %cst_21 : f32 to vector<8x256xf32>
      %333 = arith.mulf %332, %331 : vector<8x256xf32>
      %334 = math.exp %333 : vector<8x256xf32>
      %335 = math.cos %327 : vector<8x256xf32>
      %336 = arith.mulf %334, %335 : vector<8x256xf32>
      %337 = vector.broadcast %328 : vector<8x1xf32> to vector<8x256xf32>
      %338 = arith.mulf %337, %336 : vector<8x256xf32>
      %339 = arith.addf %298, %338 : vector<8x256xf32>
      %340 = arith.truncf %339 : vector<8x256xf32> to vector<8x256xbf16>
      %c0_22 = arith.constant 0 : index
      %c0_23 = arith.constant 0 : index
      %341 = vector.load %arg8[%c0_22, %c0_23] : memref<8x256xbf16, #tpu.memory_space<vmem>>, vector<8x256xbf16>
      tpu.vector_store %arg8[%c0_22, %c0_23], %340 {strides = array<i32>} : memref<8x256xbf16, #tpu.memory_space<vmem>>, vector<8x256xbf16>,
    } else {
    }
    %c0 = arith.constant 0 : index
    %c0_1 = arith.constant 0 : index
    %3 = vector.load %arg8[%c0, %c0_1] : memref<8x256xbf16, #tpu.memory_space<vmem>>, vector<8x256xbf16>
    %c0_2 = arith.constant 0 : index
    %c0_3 = arith.constant 0 : index
    %4 = vector.load %arg5[%c0_2, %c0_3] : memref<256x128xbf16, #tpu.memory_space<vmem>>, vector<256x128xbf16>
    %cst = arith.constant dense<0.000000e+00> : vector<8x128xf32>
    %5 = tpu.matmul %3, %4, %cst {dimension_numbers = #tpu.dot_dimension_numbers<[1], [0], [0], [1], [0, 0, 1, 1], [], []>} : vector<8x256xbf16>, vector<256x128xbf16>, vector<8x128xf32> -> vector<8x128xf32>
    %c0_4 = arith.constant 0 : index
    %c0_5 = arith.constant 0 : index
    %6 = vector.load %arg6[%c0_4, %c0_5] : memref<8x1xf32, #tpu.memory_space<vmem>>, vector<8x1xf32>
    %7 = vector.broadcast %6 : vector<8x1xf32> to vector<8x128xf32>
    %8 = arith.addf %5, %7 : vector<8x128xf32>
    %c0_6 = arith.constant 0 : index
    %c0_7 = arith.constant 0 : index
    %9 = vector.load %arg7[%c0_6, %c0_7] : memref<8x128xf32, #tpu.memory_space<vmem>>, vector<8x128xf32>
    tpu.vector_store %arg7[%c0_6, %c0_7], %8 {strides = array<i32>} : memref<8x128xf32, #tpu.memory_space<vmem>>, vector<8x128xf32>,
    return
  }
  func.func @transform_0(%arg0: i32, %arg1: i32) -> (i32, i32) {
    %c0_i32 = arith.constant 0 : i32
    %c0_i32_0 = arith.constant 0 : i32
    return %arg0, %c0_i32 : i32, i32
  }
  func.func @transform_1(%arg0: i32, %arg1: i32) -> (i32, i32) {
    %c0_i32 = arith.constant 0 : i32
    %c0_i32_0 = arith.constant 0 : i32
    %c0_i32_1 = arith.constant 0 : i32
    return %c0_i32, %c0_i32_0 : i32, i32
  }
  func.func @transform_2(%arg0: i32, %arg1: i32) -> (i32, i32) {
    %c0_i32 = arith.constant 0 : i32
    %c0_i32_0 = arith.constant 0 : i32
    %c0_i32_1 = arith.constant 0 : i32
    return %c0_i32, %c0_i32_0 : i32, i32
  }
  func.func @transform_3(%arg0: i32, %arg1: i32) -> (i32, i32) {
    %c0_i32 = arith.constant 0 : i32
    %c0_i32_0 = arith.constant 0 : i32
    return %c0_i32, %arg1 : i32, i32
  }
  func.func @transform_4(%arg0: i32, %arg1: i32) -> (i32, i32) {
    %c0_i32 = arith.constant 0 : i32
    %c0_i32_0 = arith.constant 0 : i32
    return %arg0, %c0_i32 : i32, i32
  }
  func.func @transform_5(%arg0: i32, %arg1: i32) -> (i32, i32) {
    %c0_i32 = arith.constant 0 : i32
    return %arg0, %arg1 : i32, i32
  }
}

</mosaic_0001>

<llo_original>
// kernel: tpu_custom_call.1
$region0: #{tpu_custom_call.1}
  #allocation0 [shape = 'u32[]', space=smem, size = 0x4, offset = 0x4, fixed_abs, tag = 'smem constant byte address 0x4 - core index']
  #allocation1 [shape = 'u32[144,128]{1,0:T(1,128)}', space=vmem, size = 0x12000, scoped, tag = 'internal scratch']
  #allocation2 [shape = 'bf16[8,256]{1,0:T(8,128)(2,1)}', space=vmem, size = 0x1000, scoped, tag = 'scratch operand']
  %s0 = inlined_call_operand.vmem [shape: f32[8,128], index: 0, kind: input, shape index: {}]
  %s1 = inlined_call_operand.vmem [shape: f32[1,256], index: 1, kind: input, shape index: {}]
  %s2 = inlined_call_operand.vmem [shape: f32[1,256], index: 2, kind: input, shape index: {}]
  %s3 = inlined_call_operand.hbm [shape: bf16[256,128], index: 3, kind: input, shape index: {}]
  %s4 = inlined_call_operand.vmem [shape: f32[8,1], index: 4, kind: input, shape index: {}]
  %s5 = inlined_call_operand.hbm [shape: f32[8,128], index: 5, kind: output, shape index: {}]
  %s6 = sld [smem:[#allocation0]]
  $region38: #{tpu_custom_call.1} parent=0
    _
  %s8 = ssub.s32 1, %s6
  %s9 = scalar_select 0, %s8, %s6
  $region1: #{tpu_custom_call.1} parent=0
    #allocation3 [shape = 'u8[65536]{0}', space=vmem, size = 0x10000, scoped, tag = 'input window, operand 3, single buffered']
    #allocation4 [shape = 's32[1]{0}', space=sflag, size = 0x4, scoped, tag = 'scoped memory for tpu_custom_call.1']
    #allocation5 [shape = 's32[1]{0}', space=sflag, size = 0x4, scoped, tag = 'scoped memory for tpu_custom_call.1']
    #allocation6 [shape = 'u8[4096]{0}', space=vmem, size = 0x1000, scoped, tag = 'output window, operand 0, single buffered']
    %10 = vsyncpa [#allocation4], 0
    %11 = vsyncpa [#allocation5], 0
    // Predicated region
    $region2: #{tpu_custom_call.1} parent=1 // pred_check
      _
    $region3: #{tpu_custom_call.1} parent=1 // pred_check_branch
      %13 = sbr.rel (0) target = $region5
    $region4: #{tpu_custom_call.1} parent=1 // pred_region
      _
    $region5: #{tpu_custom_call.1} parent=1 // pred_fallthru
      _
    // Predicated region
    $region6: #{tpu_custom_call.1} parent=1 // pred_check
      _
    $region7: #{tpu_custom_call.1} parent=1 // pred_check_branch
      %15 = sbr.rel (0) target = $region9
    $region8: #{tpu_custom_call.1} parent=1 // pred_region
      _
    $region9: #{tpu_custom_call.1} parent=1 // pred_fallthru
      _
    // Predicated region
    $region10: #{tpu_custom_call.1} parent=1 // pred_check
      _
    $region11: #{tpu_custom_call.1} parent=1 // pred_check_branch
      %17 = sbr.rel (0) target = $region13
    $region12: #{tpu_custom_call.1} parent=1 // pred_region
      _
    $region13: #{tpu_custom_call.1} parent=1 // pred_fallthru
      _
    // Predicated region
    $region14: #{tpu_custom_call.1} parent=1 // pred_check
      _
    $region15: #{tpu_custom_call.1} parent=1 // pred_check_branch
      %19 = sbr.rel (0) target = $region17
    $region16: #{tpu_custom_call.1} parent=1 // pred_region
      %s21 = ssub.s32 2048, 2048
      %22 = vsyncadd [#allocation4], %s21
      %s23 = sshll.u32 [#allocation3], 4
      %s24 = int_to_ptr.vmem [resolvable:$true] %s23
      %29 = dma.hbm_to_vmem [thread:$0]  %s3, 2048, %s24, [#allocation4], 64, 64, 4
    $region17: #{tpu_custom_call.1} parent=1 // pred_fallthru
      _
    // Predicated region
    $region18: #{tpu_custom_call.1} parent=1 // pred_check
      _
    $region19: #{tpu_custom_call.1} parent=1 // pred_check_branch
      %31 = sbr.rel (0) target = $region21
    $region20: #{tpu_custom_call.1} parent=1 // pred_region
      _
    $region21: #{tpu_custom_call.1} parent=1 // pred_fallthru
      _
    // Predicated region
    $region22: #{tpu_custom_call.1} parent=1 // pred_check
      _
    $region23: #{tpu_custom_call.1} parent=1 // pred_check_branch
      %33 = sbr.rel (0) target = $region25
    $region24: #{tpu_custom_call.1} parent=1 // pred_region
      %34 = dma.done [#allocation4], 2048
    $region25: #{tpu_custom_call.1} parent=1 // pred_fallthru
      _
    %p36 = scmp.eq.s32.totalorder 0, 0
    // Predicated region
    $region26: #{tpu_custom_call.1} parent=1 // pred_check
      %p37 = pneg %p36
    $region27: #{tpu_custom_call.1} parent=1 // pred_check_branch
      %39 = sbr.rel (%p37) target = $region29
    $region28: #{tpu_custom_call.1} parent=1 // pred_region
      %v40 = vld [vmem:[%s1] sm:$0x3]
      %v41 = vld [vmem:[%s2] sm:$0x3]
      %v42 = vld [vmem:[%s0] sm:$0xff]
      %v44 = vlaneseq
      %v45 = vshrl.u32 %v44, 7
      %v46 = vsub.s32 0, %v45
      %v47 = vrot.slane %v40, %v46
      %v48 = vlaneseq
      %v49 = vshrl.u32 %v48, 7
      %v50 = vsub.s32 1, %v49
      %v51 = vrot.slane %v40, %v50
      %55 = vset.pattern.permute.xlu0 0
      %56 = vperm.xlu0 %55, %v42
      %v57 = vpop.permute.xlu0 %56
      %v59 = vsub.f32 %v47, %v57
      %v60 = vsub.f32 %v51, %v57
      %v62 = vlaneseq
      %v63 = vshrl.u32 %v62, 7
      %v64 = vsub.s32 0, %v63
      %v65 = vrot.slane %v41, %v64
      %v66 = vlaneseq
      %v67 = vshrl.u32 %v66, 7
      %v68 = vsub.s32 1, %v67
      %v69 = vrot.slane %v41, %v68
      %72 = vset.pattern.permute.xlu0 1
      %73 = vperm.xlu0 %72, %v42
      %v74 = vpop.permute.xlu0 %73
      %v76 = vsub.f32 %v65, %v74
      %v77 = vsub.f32 %v69, %v74
      %78 = vset.pattern.permute.xlu0 3
      %79 = vperm.xlu0 %78, %v42
      %v80 = vpop.permute.xlu0 %79
      %v82 = vmul.f32 %v76, %v80
      %v83 = vmul.f32 %v77, %v80
      %84 = vset.pattern.permute.xlu0 2
      %85 = vperm.xlu0 %84, %v42
      %v86 = vpop.permute.xlu0 %85
      %v88 = vmul.f32 %v59, %v86
      %v89 = vmul.f32 %v60, %v86
      %v90 = vadd.f32 %v82, %v88
      %v91 = vadd.f32 %v83, %v89
      %92 = vset.pattern.permute.xlu0 4
      %93 = vperm.xlu0 %92, %v42
      %v94 = vpop.permute.xlu0 %93
      %v96 = vmul.f32 %v76, %v94
      %v97 = vmul.f32 %v77, %v94
      %98 = vset.pattern.permute.xlu0 5
      %99 = vperm.xlu0 %98, %v42
      %v100 = vpop.permute.xlu0 %99
      %v102 = vmul.f32 %v59, %v100
      %v103 = vmul.f32 %v60, %v100
      %v104 = vsub.f32 %v96, %v102
      %v105 = vsub.f32 %v97, %v103
      %106 = vset.pattern.permute.xlu0 6
      %107 = vperm.xlu0 %106, %v42
      %v108 = vpop.permute.xlu0 %107
      %v110 = vmul.f32 %v76, %v108
      %v111 = vmul.f32 %v77, %v108
      %112 = vset.pattern.permute.xlu0 7
      %113 = vperm.xlu0 %112, %v42
      %v114 = vpop.permute.xlu0 %113
      %v116 = vmul.f32 %v59, %v114
      %v117 = vmul.f32 %v60, %v114
      %v118 = vsub.f32 %v110, %v116
      %v119 = vsub.f32 %v111, %v117
      %v120 = vmul.f32 %v90, %v90
      %v121 = vmul.f32 %v91, %v91
      %v122 = vmul.f32 %v104, %v104
      %v123 = vmul.f32 %v105, %v105
      %v124 = vadd.f32 %v120, %v122
      %v125 = vadd.f32 %v121, %v123
      %v126 = vmul.f32 %v124, -0.5
      %v127 = vmul.f32 %v125, -0.5
      %v128 = vmul.f32 %v126, 1.442695
      %v129 = vpow.pop %v128
      %v130 = vmul.f32 %v127, 1.442695
      %v131 = vpow.pop %v130
      %v132 = vand.u32 2147483647, %v118
      %vm133 = vcmp.le.f32.partialorder %v132, 0.7853982
      %vm134 = vcmp.lt.s32.totalorder %v118, 0
      %v135 = vand.u32 %v118, 2139095040
      %v136 = vshrl.u32 %v135, 23
      %v137 = vsub.s32 %v136, 127
      %v138 = vand.u32 2147483647, %v118
      %v139 = vand.u32 %v138, 8388607
      %v140 = vor.u32 %v139, 8388608
      %v141 = vsub.s32 0, %v140
      %v142 = vadd.s32 %v137, 1
      %vm143 = vcmp.gt.s32.totalorder %v142, 0
      %v144 = vsel %vm143, %v142, 0
      %v145 = vshrl.u32 %v144, 5
      %v146 = vand.u32 %v144, 31
      %v147 = vsub.s32 32, %v146
      %v148 = vshrl.u32 683565275, %v147
      %v149 = vshll.u32 683565275, %v146
      %v150 = vshrl.u32 2475754826, %v147
      %v151 = vor.u32 %v149, %v150
      %v152 = vshll.u32 2475754826, %v146
      %v153 = vshrl.u32 2131351028, %v147
      %v154 = vor.u32 %v152, %v153
      %v155 = vshll.u32 2131351028, %v146
      %v156 = vshrl.u32 2102212464, %v147
      %v157 = vor.u32 %v155, %v156
      %v158 = vshll.u32 2102212464, %v146
      %v159 = vshrl.u32 920167782, %v147
      %v160 = vor.u32 %v158, %v159
      %v161 = vshll.u32 920167782, %v146
      %v162 = vshrl.u32 1326507024, %v147
      %v163 = vor.u32 %v161, %v162
      %vm164 = vcmp.lt.s32.totalorder %v145, 1
      %vm165 = vcmp.lt.s32.totalorder %v145, 2
      %vm166 = vcmp.lt.s32.totalorder %v145, 3
      %vm167 = vcmp.lt.s32.totalorder %v145, 4
      %v168 = vsel %vm164, %v148, %v151
      %v169 = vsel %vm167, %v157, 2102212464
      %v170 = vsel %vm166, %v154, %v169
      %v171 = vsel %vm165, %v168, %v170
      %v172 = vsel %vm164, %v151, %v154
      %v173 = vsel %vm167, %v160, 920167782
      %v174 = vsel %vm166, %v157, %v173
      %v175 = vsel %vm165, %v172, %v174
      %v176 = vsel %vm164, %v154, %v157
      %v177 = vsel %vm167, %v163, 1326507024
      %v178 = vsel %vm166, %v160, %v177
      %v179 = vsel %vm165, %v176, %v178
      %v180 = vshll.u32 %v140, 8
      %v181 = vmul.u32.u64.compose %v180, %v179
      %v182 = vextract.low.u32 %v181
      %v183 = vextract.high.u32 %v181
      %v184 = vmul.u32.u64.compose %v180, %v175
      %v185 = vextract.low.u32 %v184
      %v186 = vextract.high.u32 %v184
      %v187 = vmul.u32 %v180, %v171
      %v188 = vadd.s32 %v183, %v185
      %vm189 = vc.u32 %v183, %v185
      %v190 = vadd.s32 %v186, 1
      %v191 = vsel %vm189, %v190, %v186
      %v192 = vadd.s32 %v187, %v191
      %v193 = vadd.s32 %v192, 536870912
      %v194 = vshrl.u32 %v193, 30
      %v195 = vshll.u32 %v194, 30
      %v196 = vsub.s32 %v192, %v195
      %vm197 = vcmp.lt.s32.totalorder %v196, 0
      %v198 = vsub.s32 0, %v196
      %v199 = vsel %vm197, %v198, %v196
      %v200 = vclz %v199
      %v201 = vsub.s32 %v200, 2
      %vm202 = vcmp.gt.s32.totalorder 0, %v201
      %v203 = vsel %vm202, 0, %v201
      %v204 = vsub.s32 32, %v203
      %v205 = vshll.u32 %v196, %v203
      %v206 = vshrl.u32 %v188, %v204
      %v207 = vor.u32 %v205, %v206
      %v208 = vsub.s32 4294967266, %v203
      %v209 = vadd.s32 %v208, 127
      %v210 = vshll.u32 %v209, 23
      %v211 = vor.u32 4788187, %v210
      %v212 = vand.u32 2147483647, %v211
      %v214 = vcvt.s32.f32 %v207
      %v215 = vmul.f32 %v214, %v212
      %v216 = vxor.u32 %v215, 2147483648
      %v217 = vsel %vm134, %v216, %v215
      %v218 = vsub.s32 4, %v194
      %v219 = vsel %vm134, %v218, %v194
      %v220 = vsel %vm133, %v118, %v217
      %v221 = vsel %vm133, 0, %v219
      %v222 = vcosq.f32.pop %v220
      %v223 = vsinq.f32.pop %v220
      %vm224 = vweird.f32 %v118
      %v225 = vand.u32 %v221, 3
      %vm226 = vcmp.lt.s32.totalorder %v225, 2
      %vm227 = vcmp.eq.s32.totalorder %v225, 0
      %v228 = vxor.u32 %v223, 2147483648
      %v229 = vsel %vm227, %v222, %v228
      %vm230 = vcmp.eq.s32.totalorder %v225, 2
      %v231 = vxor.u32 %v222, 2147483648
      %v232 = vsel %vm230, %v231, %v223
      %v233 = vsel %vm226, %v229, %v232
      %v234 = vsel %vm224, nan, %v233
      %v235 = vand.u32 2147483647, %v119
      %vm236 = vcmp.le.f32.partialorder %v235, 0.7853982
      %vm237 = vcmp.lt.s32.totalorder %v119, 0
      %v238 = vand.u32 %v119, 2139095040
      %v239 = vshrl.u32 %v238, 23
      %v240 = vsub.s32 %v239, 127
      %v241 = vand.u32 2147483647, %v119
      %v242 = vand.u32 %v241, 8388607
      %v243 = vor.u32 %v242, 8388608
      %v244 = vsub.s32 0, %v243
      %v245 = vadd.s32 %v240, 1
      %vm246 = vcmp.gt.s32.totalorder %v245, 0
      %v247 = vsel %vm246, %v245, 0
      %v248 = vshrl.u32 %v247, 5
      %v249 = vand.u32 %v247, 31
      %v250 = vsub.s32 32, %v249
      %v251 = vshrl.u32 683565275, %v250
      %v252 = vshll.u32 683565275, %v249
      %v253 = vshrl.u32 2475754826, %v250
      %v254 = vor.u32 %v252, %v253
      %v255 = vshll.u32 2475754826, %v249
      %v256 = vshrl.u32 2131351028, %v250
      %v257 = vor.u32 %v255, %v256
      %v258 = vshll.u32 2131351028, %v249
      %v259 = vshrl.u32 2102212464, %v250
      %v260 = vor.u32 %v258, %v259
      %v261 = vshll.u32 2102212464, %v249
      %v262 = vshrl.u32 920167782, %v250
      %v263 = vor.u32 %v261, %v262
      %v264 = vshll.u32 920167782, %v249
      %v265 = vshrl.u32 1326507024, %v250
      %v266 = vor.u32 %v264, %v265
      %vm267 = vcmp.lt.s32.totalorder %v248, 1
      %vm268 = vcmp.lt.s32.totalorder %v248, 2
      %vm269 = vcmp.lt.s32.totalorder %v248, 3
      %vm270 = vcmp.lt.s32.totalorder %v248, 4
      %v271 = vsel %vm267, %v251, %v254
      %v272 = vsel %vm270, %v260, 2102212464
      %v273 = vsel %vm269, %v257, %v272
      %v274 = vsel %vm268, %v271, %v273
      %v275 = vsel %vm267, %v254, %v257
      %v276 = vsel %vm270, %v263, 920167782
      %v277 = vsel %vm269, %v260, %v276
      %v278 = vsel %vm268, %v275, %v277
      %v279 = vsel %vm267, %v257, %v260
      %v280 = vsel %vm270, %v266, 1326507024
      %v281 = vsel %vm269, %v263, %v280
      %v282 = vsel %vm268, %v279, %v281
      %v283 = vshll.u32 %v243, 8
      %v284 = vmul.u32.u64.compose %v283, %v282
      %v285 = vextract.low.u32 %v284
      %v286 = vextract.high.u32 %v284
      %v287 = vmul.u32.u64.compose %v283, %v278
      %v288 = vextract.low.u32 %v287
      %v289 = vextract.high.u32 %v287
      %v290 = vmul.u32 %v283, %v274
      %v291 = vadd.s32 %v286, %v288
      %vm292 = vc.u32 %v286, %v288
      %v293 = vadd.s32 %v289, 1
      %v294 = vsel %vm292, %v293, %v289
      %v295 = vadd.s32 %v290, %v294
      %v296 = vadd.s32 %v295, 536870912
      %v297 = vshrl.u32 %v296, 30
      %v298 = vshll.u32 %v297, 30
      %v299 = vsub.s32 %v295, %v298
      %vm300 = vcmp.lt.s32.totalorder %v299, 0
      %v301 = vsub.s32 0, %v299
      %v302 = vsel %vm300, %v301, %v299
      %v303 = vclz %v302
      %v304 = vsub.s32 %v303, 2
      %vm305 = vcmp.gt.s32.totalorder 0, %v304
      %v306 = vsel %vm305, 0, %v304
      %v307 = vsub.s32 32, %v306
      %v308 = vshll.u32 %v299, %v306
      %v309 = vshrl.u32 %v291, %v307
      %v310 = vor.u32 %v308, %v309
      %v311 = vsub.s32 4294967266, %v306
      %v312 = vadd.s32 %v311, 127
      %v313 = vshll.u32 %v312, 23
      %v314 = vor.u32 4788187, %v313
      %v315 = vand.u32 2147483647, %v314
      %v317 = vcvt.s32.f32 %v310
      %v318 = vmul.f32 %v317, %v315
      %v319 = vxor.u32 %v318, 2147483648
      %v320 = vsel %vm237, %v319, %v318
      %v321 = vsub.s32 4, %v297
      %v322 = vsel %vm237, %v321, %v297
      %v323 = vsel %vm236, %v119, %v320
      %v324 = vsel %vm236, 0, %v322
      %v325 = vcosq.f32.pop %v323
      %v326 = vsinq.f32.pop %v323
      %vm327 = vweird.f32 %v119
      %v328 = vand.u32 %v324, 3
      %vm329 = vcmp.lt.s32.totalorder %v328, 2
      %vm330 = vcmp.eq.s32.totalorder %v328, 0
      %v331 = vxor.u32 %v326, 2147483648
      %v332 = vsel %vm330, %v325, %v331
      %vm333 = vcmp.eq.s32.totalorder %v328, 2
      %v334 = vxor.u32 %v325, 2147483648
      %v335 = vsel %vm333, %v334, %v326
      %v336 = vsel %vm329, %v332, %v335
      %v337 = vsel %vm327, nan, %v336
      %v338 = vmul.f32 %v129, %v234
      %v339 = vmul.f32 %v131, %v337
      %340 = vset.pattern.permute.xlu0 8
      %341 = vperm.xlu0 %340, %v42
      %v342 = vpop.permute.xlu0 %341
      %v344 = vmul.f32 %v342, %v338
      %v345 = vmul.f32 %v342, %v339
      %346 = vset.pattern.permute.xlu0 16
      %347 = vperm.xlu0 %346, %v42
      %v348 = vpop.permute.xlu0 %347
      %v350 = vsub.f32 %v47, %v348
      %v351 = vsub.f32 %v51, %v348
      %352 = vset.pattern.permute.xlu0 17
      %353 = vperm.xlu0 %352, %v42
      %v354 = vpop.permute.xlu0 %353
      %v356 = vsub.f32 %v65, %v354
      %v357 = vsub.f32 %v69, %v354
      %358 = vset.pattern.permute.xlu0 19
      %359 = vperm.xlu0 %358, %v42
      %v360 = vpop.permute.xlu0 %359
      %v362 = vmul.f32 %v356, %v360
      %v363 = vmul.f32 %v357, %v360
      %364 = vset.pattern.permute.xlu0 18
      %365 = vperm.xlu0 %364, %v42
      %v366 = vpop.permute.xlu0 %365
      %v368 = vmul.f32 %v350, %v366
      %v369 = vmul.f32 %v351, %v366
      %v370 = vadd.f32 %v362, %v368
      %v371 = vadd.f32 %v363, %v369
      %372 = vset.pattern.permute.xlu0 20
      %373 = vperm.xlu0 %372, %v42
      %v374 = vpop.permute.xlu0 %373
      %v376 = vmul.f32 %v356, %v374
      %v377 = vmul.f32 %v357, %v374
      %378 = vset.pattern.permute.xlu0 21
      %379 = vperm.xlu0 %378, %v42
      %v380 = vpop.permute.xlu0 %379
      %v382 = vmul.f32 %v350, %v380
      %v383 = vmul.f32 %v351, %v380
      %v384 = vsub.f32 %v376, %v382
      %v385 = vsub.f32 %v377, %v383
      %386 = vset.pattern.permute.xlu0 22
      %387 = vperm.xlu0 %386, %v42
      %v388 = vpop.permute.xlu0 %387
      %v390 = vmul.f32 %v356, %v388
      %v391 = vmul.f32 %v357, %v388
      %392 = vset.pattern.permute.xlu0 23
      %393 = vperm.xlu0 %392, %v42
      %v394 = vpop.permute.xlu0 %393
      %v396 = vmul.f32 %v350, %v394
      %v397 = vmul.f32 %v351, %v394
      %v398 = vsub.f32 %v390, %v396
      %v399 = vsub.f32 %v391, %v397
      %v400 = vmul.f32 %v370, %v370
      %v401 = vmul.f32 %v371, %v371
      %v402 = vmul.f32 %v384, %v384
      %v403 = vmul.f32 %v385, %v385
      %v404 = vadd.f32 %v400, %v402
      %v405 = vadd.f32 %v401, %v403
      %v406 = vmul.f32 %v404, -0.5
      %v407 = vmul.f32 %v405, -0.5
      %v408 = vmul.f32 %v406, 1.442695
      %v409 = vpow.pop %v408
      %v410 = vmul.f32 %v407, 1.442695
      %v411 = vpow.pop %v410
      %v412 = vand.u32 2147483647, %v398
      %vm413 = vcmp.le.f32.partialorder %v412, 0.7853982
      %vm414 = vcmp.lt.s32.totalorder %v398, 0
      %v415 = vand.u32 %v398, 2139095040
      %v416 = vshrl.u32 %v415, 23
      %v417 = vsub.s32 %v416, 127
      %v418 = vand.u32 2147483647, %v398
      %v419 = vand.u32 %v418, 8388607
      %v420 = vor.u32 %v419, 8388608
      %v421 = vsub.s32 0, %v420
      %v422 = vadd.s32 %v417, 1
      %vm423 = vcmp.gt.s32.totalorder %v422, 0
      %v424 = vsel %vm423, %v422, 0
      %v425 = vshrl.u32 %v424, 5
      %v426 = vand.u32 %v424, 31
      %v427 = vsub.s32 32, %v426
      %v428 = vshrl.u32 683565275, %v427
      %v429 = vshll.u32 683565275, %v426
      %v430 = vshrl.u32 2475754826, %v427
      %v431 = vor.u32 %v429, %v430
      %v432 = vshll.u32 2475754826, %v426
      %v433 = vshrl.u32 2131351028, %v427
      %v434 = vor.u32 %v432, %v433
      %v435 = vshll.u32 2131351028, %v426
      %v436 = vshrl.u32 2102212464, %v427
      %v437 = vor.u32 %v435, %v436
      %v438 = vshll.u32 2102212464, %v426
      %v439 = vshrl.u32 920167782, %v427
      %v440 = vor.u32 %v438, %v439
      %v441 = vshll.u32 920167782, %v426
      %v442 = vshrl.u32 1326507024, %v427
      %v443 = vor.u32 %v441, %v442
      %vm444 = vcmp.lt.s32.totalorder %v425, 1
      %vm445 = vcmp.lt.s32.totalorder %v425, 2
      %vm446 = vcmp.lt.s32.totalorder %v425, 3
      %vm447 = vcmp.lt.s32.totalorder %v425, 4
      %v448 = vsel %vm444, %v428, %v431
      %v449 = vsel %vm447, %v437, 2102212464
      %v450 = vsel %vm446, %v434, %v449
      %v451 = vsel %vm445, %v448, %v450
      %v452 = vsel %vm444, %v431, %v434
      %v453 = vsel %vm447, %v440, 920167782
      %v454 = vsel %vm446, %v437, %v453
      %v455 = vsel %vm445, %v452, %v454
      %v456 = vsel %vm444, %v434, %v437
      %v457 = vsel %vm447, %v443, 1326507024
      %v458 = vsel %vm446, %v440, %v457
      %v459 = vsel %vm445, %v456, %v458
      %v460 = vshll.u32 %v420, 8
      %v461 = vmul.u32.u64.compose %v460, %v459
      %v462 = vextract.low.u32 %v461
      %v463 = vextract.high.u32 %v461
      %v464 = vmul.u32.u64.compose %v460, %v455
      %v465 = vextract.low.u32 %v464
      %v466 = vextract.high.u32 %v464
      %v467 = vmul.u32 %v460, %v451
      %v468 = vadd.s32 %v463, %v465
      %vm469 = vc.u32 %v463, %v465
      %v470 = vadd.s32 %v466, 1
      %v471 = vsel %vm469, %v470, %v466
      %v472 = vadd.s32 %v467, %v471
      %v473 = vadd.s32 %v472, 536870912
      %v474 = vshrl.u32 %v473, 30
      %v475 = vshll.u32 %v474, 30
      %v476 = vsub.s32 %v472, %v475
      %vm477 = vcmp.lt.s32.totalorder %v476, 0
      %v478 = vsub.s32 0, %v476
      %v479 = vsel %vm477, %v478, %v476
      %v480 = vclz %v479
      %v481 = vsub.s32 %v480, 2
      %vm482 = vcmp.gt.s32.totalorder 0, %v481
      %v483 = vsel %vm482, 0, %v481
      %v484 = vsub.s32 32, %v483
      %v485 = vshll.u32 %v476, %v483
      %v486 = vshrl.u32 %v468, %v484
      %v487 = vor.u32 %v485, %v486
      %v488 = vsub.s32 4294967266, %v483
      %v489 = vadd.s32 %v488, 127
      %v490 = vshll.u32 %v489, 23
      %v491 = vor.u32 4788187, %v490
      %v492 = vand.u32 2147483647, %v491
      %v494 = vcvt.s32.f32 %v487
      %v495 = vmul.f32 %v494, %v492
      %v496 = vxor.u32 %v495, 2147483648
      %v497 = vsel %vm414, %v496, %v495
      %v498 = vsub.s32 4, %v474
      %v499 = vsel %vm414, %v498, %v474
      %v500 = vsel %vm413, %v398, %v497
      %v501 = vsel %vm413, 0, %v499
      %v502 = vcosq.f32.pop %v500
      %v503 = vsinq.f32.pop %v500
      %vm504 = vweird.f32 %v398
      %v505 = vand.u32 %v501, 3
      %vm506 = vcmp.lt.s32.totalorder %v505, 2
      %vm507 = vcmp.eq.s32.totalorder %v505, 0
      %v508 = vxor.u32 %v503, 2147483648
      %v509 = vsel %vm507, %v502, %v508
      %vm510 = vcmp.eq.s32.totalorder %v505, 2
      %v511 = vxor.u32 %v502, 2147483648
      %v512 = vsel %vm510, %v511, %v503
      %v513 = vsel %vm506, %v509, %v512
      %v514 = vsel %vm504, nan, %v513
      %v515 = vand.u32 2147483647, %v399
      %vm516 = vcmp.le.f32.partialorder %v515, 0.7853982
      %vm517 = vcmp.lt.s32.totalorder %v399, 0
      %v518 = vand.u32 %v399, 2139095040
      %v519 = vshrl.u32 %v518, 23
      %v520 = vsub.s32 %v519, 127
      %v521 = vand.u32 2147483647, %v399
      %v522 = vand.u32 %v521, 8388607
      %v523 = vor.u32 %v522, 8388608
      %v524 = vsub.s32 0, %v523
      %v525 = vadd.s32 %v520, 1
      %vm526 = vcmp.gt.s32.totalorder %v525, 0
      %v527 = vsel %vm526, %v525, 0
      %v528 = vshrl.u32 %v527, 5
      %v529 = vand.u32 %v527, 31
      %v530 = vsub.s32 32, %v529
      %v531 = vshrl.u32 683565275, %v530
      %v532 = vshll.u32 683565275, %v529
      %v533 = vshrl.u32 2475754826, %v530
      %v534 = vor.u32 %v532, %v533
      %v535 = vshll.u32 2475754826, %v529
      %v536 = vshrl.u32 2131351028, %v530
      %v537 = vor.u32 %v535, %v536
      %v538 = vshll.u32 2131351028, %v529
      %v539 = vshrl.u32 2102212464, %v530
      %v540 = vor.u32 %v538, %v539
      %v541 = vshll.u32 2102212464, %v529
      %v542 = vshrl.u32 920167782, %v530
      %v543 = vor.u32 %v541, %v542
      %v544 = vshll.u32 920167782, %v529
      %v545 = vshrl.u32 1326507024, %v530
      %v546 = vor.u32 %v544, %v545
      %vm547 = vcmp.lt.s32.totalorder %v528, 1
      %vm548 = vcmp.lt.s32.totalorder %v528, 2
      %vm549 = vcmp.lt.s32.totalorder %v528, 3
      %vm550 = vcmp.lt.s32.totalorder %v528, 4
      %v551 = vsel %vm547, %v531, %v534
      %v552 = vsel %vm550, %v540, 2102212464
      %v553 = vsel %vm549, %v537, %v552
      %v554 = vsel %vm548, %v551, %v553
      %v555 = vsel %vm547, %v534, %v537
      %v556 = vsel %vm550, %v543, 920167782
      %v557 = vsel %vm549, %v540, %v556
      %v558 = vsel %vm548, %v555, %v557
      %v559 = vsel %vm547, %v537, %v540
      %v560 = vsel %vm550, %v546, 1326507024
      %v561 = vsel %vm549, %v543, %v560
      %v562 = vsel %vm548, %v559, %v561
      %v563 = vshll.u32 %v523, 8
      %v564 = vmul.u32.u64.compose %v563, %v562
      %v565 = vextract.low.u32 %v564
      %v566 = vextract.high.u32 %v564
      %v567 = vmul.u32.u64.compose %v563, %v558
      %v568 = vextract.low.u32 %v567
      %v569 = vextract.high.u32 %v567
      %v570 = vmul.u32 %v563, %v554
      %v571 = vadd.s32 %v566, %v568
      %vm572 = vc.u32 %v566, %v568
      %v573 = vadd.s32 %v569, 1
      %v574 = vsel %vm572, %v573, %v569
      %v575 = vadd.s32 %v570, %v574
      %v576 = vadd.s32 %v575, 536870912
      %v577 = vshrl.u32 %v576, 30
      %v578 = vshll.u32 %v577, 30
      %v579 = vsub.s32 %v575, %v578
      %vm580 = vcmp.lt.s32.totalorder %v579, 0
      %v581 = vsub.s32 0, %v579
      %v582 = vsel %vm580, %v581, %v579
      %v583 = vclz %v582
      %v584 = vsub.s32 %v583, 2
      %vm585 = vcmp.gt.s32.totalorder 0, %v584
      %v586 = vsel %vm585, 0, %v584
      %v587 = vsub.s32 32, %v586
      %v588 = vshll.u32 %v579, %v586
      %v589 = vshrl.u32 %v571, %v587
      %v590 = vor.u32 %v588, %v589
      %v591 = vsub.s32 4294967266, %v586
      %v592 = vadd.s32 %v591, 127
      %v593 = vshll.u32 %v592, 23
      %v594 = vor.u32 4788187, %v593
      %v595 = vand.u32 2147483647, %v594
      %v597 = vcvt.s32.f32 %v590
      %v598 = vmul.f32 %v597, %v595
      %v599 = vxor.u32 %v598, 2147483648
      %v600 = vsel %vm517, %v599, %v598
      %v601 = vsub.s32 4, %v577
      %v602 = vsel %vm517, %v601, %v577
      %v603 = vsel %vm516, %v399, %v600
      %v604 = vsel %vm516, 0, %v602
      %v605 = vcosq.f32.pop %v603
      %v606 = vsinq.f32.pop %v603
      %vm607 = vweird.f32 %v399
      %v608 = vand.u32 %v604, 3
      %vm609 = vcmp.lt.s32.totalorder %v608, 2
      %vm610 = vcmp.eq.s32.totalorder %v608, 0
      %v611 = vxor.u32 %v606, 2147483648
      %v612 = vsel %vm610, %v605, %v611
      %vm613 = vcmp.eq.s32.totalorder %v608, 2
      %v614 = vxor.u32 %v605, 2147483648
      %v615 = vsel %vm613, %v614, %v606
      %v616 = vsel %vm609, %v612, %v615
      %v617 = vsel %vm607, nan, %v616
      %v618 = vmul.f32 %v409, %v514
      %v619 = vmul.f32 %v411, %v617
      %620 = vset.pattern.permute.xlu0 24
      %621 = vperm.xlu0 %620, %v42
      %v622 = vpop.permute.xlu0 %621
      %v624 = vmul.f32 %v622, %v618
      %v625 = vmul.f32 %v622, %v619
      %v626 = vadd.f32 %v344, %v624
      %v627 = vadd.f32 %v345, %v625
      %628 = vset.pattern.permute.xlu0 32
      %629 = vperm.xlu0 %628, %v42
      %v630 = vpop.permute.xlu0 %629
      %v632 = vsub.f32 %v47, %v630
      %v633 = vsub.f32 %v51, %v630
      %634 = vset.pattern.permute.xlu0 33
      %635 = vperm.xlu0 %634, %v42
      %v636 = vpop.permute.xlu0 %635
      %v638 = vsub.f32 %v65, %v636
      %v639 = vsub.f32 %v69, %v636
      %640 = vset.pattern.permute.xlu0 35
      %641 = vperm.xlu0 %640, %v42
      %v642 = vpop.permute.xlu0 %641
      %v644 = vmul.f32 %v638, %v642
      %v645 = vmul.f32 %v639, %v642
      %646 = vset.pattern.permute.xlu0 34
      %647 = vperm.xlu0 %646, %v42
      %v648 = vpop.permute.xlu0 %647
      %v650 = vmul.f32 %v632, %v648
      %v651 = vmul.f32 %v633, %v648
      %v652 = vadd.f32 %v644, %v650
      %v653 = vadd.f32 %v645, %v651
      %654 = vset.pattern.permute.xlu0 36
      %655 = vperm.xlu0 %654, %v42
      %v656 = vpop.permute.xlu0 %655
      %v658 = vmul.f32 %v638, %v656
      %v659 = vmul.f32 %v639, %v656
      %660 = vset.pattern.permute.xlu0 37
      %661 = vperm.xlu0 %660, %v42
      %v662 = vpop.permute.xlu0 %661
      %v664 = vmul.f32 %v632, %v662
      %v665 = vmul.f32 %v633, %v662
      %v666 = vsub.f32 %v658, %v664
      %v667 = vsub.f32 %v659, %v665
      %668 = vset.pattern.permute.xlu0 38
      %669 = vperm.xlu0 %668, %v42
      %v670 = vpop.permute.xlu0 %669
      %v672 = vmul.f32 %v638, %v670
      %v673 = vmul.f32 %v639, %v670
      %674 = vset.pattern.permute.xlu0 39
      %675 = vperm.xlu0 %674, %v42
      %v676 = vpop.permute.xlu0 %675
      %v678 = vmul.f32 %v632, %v676
      %v679 = vmul.f32 %v633, %v676
      %v680 = vsub.f32 %v672, %v678
      %v681 = vsub.f32 %v673, %v679
      %v682 = vmul.f32 %v652, %v652
      %v683 = vmul.f32 %v653, %v653
      %v684 = vmul.f32 %v666, %v666
      %v685 = vmul.f32 %v667, %v667
      %v686 = vadd.f32 %v682, %v684
      %v687 = vadd.f32 %v683, %v685
      %v688 = vmul.f32 %v686, -0.5
      %v689 = vmul.f32 %v687, -0.5
      %v690 = vmul.f32 %v688, 1.442695
      %v691 = vpow.pop %v690
      %v692 = vmul.f32 %v689, 1.442695
      %v693 = vpow.pop %v692
      %v694 = vand.u32 2147483647, %v680
      %vm695 = vcmp.le.f32.partialorder %v694, 0.7853982
      %vm696 = vcmp.lt.s32.totalorder %v680, 0
      %v697 = vand.u32 %v680, 2139095040
      %v698 = vshrl.u32 %v697, 23
      %v699 = vsub.s32 %v698, 127
      %v700 = vand.u32 2147483647, %v680
      %v701 = vand.u32 %v700, 8388607
      %v702 = vor.u32 %v701, 8388608
      %v703 = vsub.s32 0, %v702
      %v704 = vadd.s32 %v699, 1
      %vm705 = vcmp.gt.s32.totalorder %v704, 0
      %v706 = vsel %vm705, %v704, 0
      %v707 = vshrl.u32 %v706, 5
      %v708 = vand.u32 %v706, 31
      %v709 = vsub.s32 32, %v708
      %v710 = vshrl.u32 683565275, %v709
      %v711 = vshll.u32 683565275, %v708
      %v712 = vshrl.u32 2475754826, %v709
      %v713 = vor.u32 %v711, %v712
      %v714 = vshll.u32 2475754826, %v708
      %v715 = vshrl.u32 2131351028, %v709
      %v716 = vor.u32 %v714, %v715
      %v717 = vshll.u32 2131351028, %v708
      %v718 = vshrl.u32 2102212464, %v709
      %v719 = vor.u32 %v717, %v718
      %v720 = vshll.u32 2102212464, %v708
      %v721 = vshrl.u32 920167782, %v709
      %v722 = vor.u32 %v720, %v721
      %v723 = vshll.u32 920167782, %v708
      %v724 = vshrl.u32 1326507024, %v709
      %v725 = vor.u32 %v723, %v724
      %vm726 = vcmp.lt.s32.totalorder %v707, 1
      %vm727 = vcmp.lt.s32.totalorder %v707, 2
      %vm728 = vcmp.lt.s32.totalorder %v707, 3
      %vm729 = vcmp.lt.s32.totalorder %v707, 4
      %v730 = vsel %vm726, %v710, %v713
      %v731 = vsel %vm729, %v719, 2102212464
      %v732 = vsel %vm728, %v716, %v731
      %v733 = vsel %vm727, %v730, %v732
      %v734 = vsel %vm726, %v713, %v716
      %v735 = vsel %vm729, %v722, 920167782
      %v736 = vsel %vm728, %v719, %v735
      %v737 = vsel %vm727, %v734, %v736
      %v738 = vsel %vm726, %v716, %v719
      %v739 = vsel %vm729, %v725, 1326507024
      %v740 = vsel %vm728, %v722, %v739
      %v741 = vsel %vm727, %v738, %v740
      %v742 = vshll.u32 %v702, 8
      %v743 = vmul.u32.u64.compose %v742, %v741
      %v744 = vextract.low.u32 %v743
      %v745 = vextract.high.u32 %v743
      %v746 = vmul.u32.u64.compose %v742, %v737
      %v747 = vextract.low.u32 %v746
      %v748 = vextract.high.u32 %v746
      %v749 = vmul.u32 %v742, %v733
      %v750 = vadd.s32 %v745, %v747
      %vm751 = vc.u32 %v745, %v747
      %v752 = vadd.s32 %v748, 1
      %v753 = vsel %vm751, %v752, %v748
      %v754 = vadd.s32 %v749, %v753
      %v755 = vadd.s32 %v754, 536870912
      %v756 = vshrl.u32 %v755, 30
      %v757 = vshll.u32 %v756, 30
      %v758 = vsub.s32 %v754, %v757
      %vm759 = vcmp.lt.s32.totalorder %v758, 0
      %v760 = vsub.s32 0, %v758
      %v761 = vsel %vm759, %v760, %v758
      %v762 = vclz %v761
      %v763 = vsub.s32 %v762, 2
      %vm764 = vcmp.gt.s32.totalorder 0, %v763
      %v765 = vsel %vm764, 0, %v763
      %v766 = vsub.s32 32, %v765
      %v767 = vshll.u32 %v758, %v765
      %v768 = vshrl.u32 %v750, %v766
      %v769 = vor.u32 %v767, %v768
      %v770 = vsub.s32 4294967266, %v765
      %v771 = vadd.s32 %v770, 127
      %v772 = vshll.u32 %v771, 23
      %v773 = vor.u32 4788187, %v772
      %v774 = vand.u32 2147483647, %v773
      %v776 = vcvt.s32.f32 %v769
      %v777 = vmul.f32 %v776, %v774
      %v778 = vxor.u32 %v777, 2147483648
      %v779 = vsel %vm696, %v778, %v777
      %v780 = vsub.s32 4, %v756
      %v781 = vsel %vm696, %v780, %v756
      %v782 = vsel %vm695, %v680, %v779
      %v783 = vsel %vm695, 0, %v781
      %v784 = vcosq.f32.pop %v782
      %v785 = vsinq.f32.pop %v782
      %vm786 = vweird.f32 %v680
      %v787 = vand.u32 %v783, 3
      %vm788 = vcmp.lt.s32.totalorder %v787, 2
      %vm789 = vcmp.eq.s32.totalorder %v787, 0
      %v790 = vxor.u32 %v785, 2147483648
      %v791 = vsel %vm789, %v784, %v790
      %vm792 = vcmp.eq.s32.totalorder %v787, 2
      %v793 = vxor.u32 %v784, 2147483648
      %v794 = vsel %vm792, %v793, %v785
      %v795 = vsel %vm788, %v791, %v794
      %v796 = vsel %vm786, nan, %v795
      %v797 = vand.u32 2147483647, %v681
      %vm798 = vcmp.le.f32.partialorder %v797, 0.7853982
      %vm799 = vcmp.lt.s32.totalorder %v681, 0
      %v800 = vand.u32 %v681, 2139095040
      %v801 = vshrl.u32 %v800, 23
      %v802 = vsub.s32 %v801, 127
      %v803 = vand.u32 2147483647, %v681
      %v804 = vand.u32 %v803, 8388607
      %v805 = vor.u32 %v804, 8388608
      %v806 = vsub.s32 0, %v805
      %v807 = vadd.s32 %v802, 1
      %vm808 = vcmp.gt.s32.totalorder %v807, 0
      %v809 = vsel %vm808, %v807, 0
      %v810 = vshrl.u32 %v809, 5
      %v811 = vand.u32 %v809, 31
      %v812 = vsub.s32 32, %v811
      %v813 = vshrl.u32 683565275, %v812
      %v814 = vshll.u32 683565275, %v811
      %v815 = vshrl.u32 2475754826, %v812
      %v816 = vor.u32 %v814, %v815
      %v817 = vshll.u32 2475754826, %v811
      %v818 = vshrl.u32 2131351028, %v812
      %v819 = vor.u32 %v817, %v818
      %v820 = vshll.u32 2131351028, %v811
      %v821 = vshrl.u32 2102212464, %v812
      %v822 = vor.u32 %v820, %v821
      %v823 = vshll.u32 2102212464, %v811
      %v824 = vshrl.u32 920167782, %v812
      %v825 = vor.u32 %v823, %v824
      %v826 = vshll.u32 920167782, %v811
      %v827 = vshrl.u32 1326507024, %v812
      %v828 = vor.u32 %v826, %v827
      %vm829 = vcmp.lt.s32.totalorder %v810, 1
      %vm830 = vcmp.lt.s32.totalorder %v810, 2
      %vm831 = vcmp.lt.s32.totalorder %v810, 3
      %vm832 = vcmp.lt.s32.totalorder %v810, 4
      %v833 = vsel %vm829, %v813, %v816
      %v834 = vsel %vm832, %v822, 2102212464
      %v835 = vsel %vm831, %v819, %v834
      %v836 = vsel %vm830, %v833, %v835
      %v837 = vsel %vm829, %v816, %v819
      %v838 = vsel %vm832, %v825, 920167782
      %v839 = vsel %vm831, %v822, %v838
      %v840 = vsel %vm830, %v837, %v839
      %v841 = vsel %vm829, %v819, %v822
      %v842 = vsel %vm832, %v828, 1326507024
      %v843 = vsel %vm831, %v825, %v842
      %v844 = vsel %vm830, %v841, %v843
      %v845 = vshll.u32 %v805, 8
      %v846 = vmul.u32.u64.compose %v845, %v844
      %v847 = vextract.low.u32 %v846
      %v848 = vextract.high.u32 %v846
      %v849 = vmul.u32.u64.compose %v845, %v840
      %v850 = vextract.low.u32 %v849
      %v851 = vextract.high.u32 %v849
      %v852 = vmul.u32 %v845, %v836
      %v853 = vadd.s32 %v848, %v850
      %vm854 = vc.u32 %v848, %v850
      %v855 = vadd.s32 %v851, 1
      %v856 = vsel %vm854, %v855, %v851
      %v857 = vadd.s32 %v852, %v856
      %v858 = vadd.s32 %v857, 536870912
      %v859 = vshrl.u32 %v858, 30
      %v860 = vshll.u32 %v859, 30
      %v861 = vsub.s32 %v857, %v860
      %vm862 = vcmp.lt.s32.totalorder %v861, 0
      %v863 = vsub.s32 0, %v861
      %v864 = vsel %vm862, %v863, %v861
      %v865 = vclz %v864
      %v866 = vsub.s32 %v865, 2
      %vm867 = vcmp.gt.s32.totalorder 0, %v866
      %v868 = vsel %vm867, 0, %v866
      %v869 = vsub.s32 32, %v868
      %v870 = vshll.u32 %v861, %v868
      %v871 = vshrl.u32 %v853, %v869
      %v872 = vor.u32 %v870, %v871
      %v873 = vsub.s32 4294967266, %v868
      %v874 = vadd.s32 %v873, 127
      %v875 = vshll.u32 %v874, 23
      %v876 = vor.u32 4788187, %v875
      %v877 = vand.u32 2147483647, %v876
      %v879 = vcvt.s32.f32 %v872
      %v880 = vmul.f32 %v879, %v877
      %v881 = vxor.u32 %v880, 2147483648
      %v882 = vsel %vm799, %v881, %v880
      %v883 = vsub.s32 4, %v859
      %v884 = vsel %vm799, %v883, %v859
      %v885 = vsel %vm798, %v681, %v882
      %v886 = vsel %vm798, 0, %v884
      %v887 = vcosq.f32.pop %v885
      %v888 = vsinq.f32.pop %v885
      %vm889 = vweird.f32 %v681
      %v890 = vand.u32 %v886, 3
      %vm891 = vcmp.lt.s32.totalorder %v890, 2
      %vm892 = vcmp.eq.s32.totalorder %v890, 0
      %v893 = vxor.u32 %v888, 2147483648
      %v894 = vsel %vm892, %v887, %v893
      %vm895 = vcmp.eq.s32.totalorder %v890, 2
      %v896 = vxor.u32 %v887, 2147483648
      %v897 = vsel %vm895, %v896, %v888
      %v898 = vsel %vm891, %v894, %v897
      %v899 = vsel %vm889, nan, %v898
      %v900 = vmul.f32 %v691, %v796
      %v901 = vmul.f32 %v693, %v899
      %902 = vset.pattern.permute.xlu0 40
      %903 = vperm.xlu0 %902, %v42
      %v904 = vpop.permute.xlu0 %903
      %v906 = vmul.f32 %v904, %v900
      %v907 = vmul.f32 %v904, %v901
      %v908 = vadd.f32 %v626, %v906
      %v909 = vadd.f32 %v627, %v907
      %910 = vset.pattern.permute.xlu0 48
      %911 = vperm.xlu0 %910, %v42
      %v912 = vpop.permute.xlu0 %911
      %v914 = vsub.f32 %v47, %v912
      %v915 = vsub.f32 %v51, %v912
      %916 = vset.pattern.permute.xlu0 49
      %917 = vperm.xlu0 %916, %v42
      %v918 = vpop.permute.xlu0 %917
      %v920 = vsub.f32 %v65, %v918
      %v921 = vsub.f32 %v69, %v918
      %922 = vset.pattern.permute.xlu0 51
      %923 = vperm.xlu0 %922, %v42
      %v924 = vpop.permute.xlu0 %923
      %v926 = vmul.f32 %v920, %v924
      %v927 = vmul.f32 %v921, %v924
      %928 = vset.pattern.permute.xlu0 50
      %929 = vperm.xlu0 %928, %v42
      %v930 = vpop.permute.xlu0 %929
      %v932 = vmul.f32 %v914, %v930
      %v933 = vmul.f32 %v915, %v930
      %v934 = vadd.f32 %v926, %v932
      %v935 = vadd.f32 %v927, %v933
      %936 = vset.pattern.permute.xlu0 52
      %937 = vperm.xlu0 %936, %v42
      %v938 = vpop.permute.xlu0 %937
      %v940 = vmul.f32 %v920, %v938
      %v941 = vmul.f32 %v921, %v938
      %942 = vset.pattern.permute.xlu0 53
      %943 = vperm.xlu0 %942, %v42
      %v944 = vpop.permute.xlu0 %943
      %v946 = vmul.f32 %v914, %v944
      %v947 = vmul.f32 %v915, %v944
      %v948 = vsub.f32 %v940, %v946
      %v949 = vsub.f32 %v941, %v947
      %950 = vset.pattern.permute.xlu0 54
      %951 = vperm.xlu0 %950, %v42
      %v952 = vpop.permute.xlu0 %951
      %v954 = vmul.f32 %v920, %v952
      %v955 = vmul.f32 %v921, %v952
      %956 = vset.pattern.permute.xlu0 55
      %957 = vperm.xlu0 %956, %v42
      %v958 = vpop.permute.xlu0 %957
      %v960 = vmul.f32 %v914, %v958
      %v961 = vmul.f32 %v915, %v958
      %v962 = vsub.f32 %v954, %v960
      %v963 = vsub.f32 %v955, %v961
      %v964 = vmul.f32 %v934, %v934
      %v965 = vmul.f32 %v935, %v935
      %v966 = vmul.f32 %v948, %v948
      %v967 = vmul.f32 %v949, %v949
      %v968 = vadd.f32 %v964, %v966
      %v969 = vadd.f32 %v965, %v967
      %v970 = vmul.f32 %v968, -0.5
      %v971 = vmul.f32 %v969, -0.5
      %v972 = vmul.f32 %v970, 1.442695
      %v973 = vpow.pop %v972
      %v974 = vmul.f32 %v971, 1.442695
      %v975 = vpow.pop %v974
      %v976 = vand.u32 2147483647, %v962
      %vm977 = vcmp.le.f32.partialorder %v976, 0.7853982
      %vm978 = vcmp.lt.s32.totalorder %v962, 0
      %v979 = vand.u32 %v962, 2139095040
      %v980 = vshrl.u32 %v979, 23
      %v981 = vsub.s32 %v980, 127
      %v982 = vand.u32 2147483647, %v962
      %v983 = vand.u32 %v982, 8388607
      %v984 = vor.u32 %v983, 8388608
      %v985 = vsub.s32 0, %v984
      %v986 = vadd.s32 %v981, 1
      %vm987 = vcmp.gt.s32.totalorder %v986, 0
      %v988 = vsel %vm987, %v986, 0
      %v989 = vshrl.u32 %v988, 5
      %v990 = vand.u32 %v988, 31
      %v991 = vsub.s32 32, %v990
      %v992 = vshrl.u32 683565275, %v991
      %v993 = vshll.u32 683565275, %v990
      %v994 = vshrl.u32 2475754826, %v991
      %v995 = vor.u32 %v993, %v994
      %v996 = vshll.u32 2475754826, %v990
      %v997 = vshrl.u32 2131351028, %v991
      %v998 = vor.u32 %v996, %v997
      %v999 = vshll.u32 2131351028, %v990
      %v1000 = vshrl.u32 2102212464, %v991
      %v1001 = vor.u32 %v999, %v1000
      %v1002 = vshll.u32 2102212464, %v990
      %v1003 = vshrl.u32 920167782, %v991
      %v1004 = vor.u32 %v1002, %v1003
      %v1005 = vshll.u32 920167782, %v990
      %v1006 = vshrl.u32 1326507024, %v991
      %v1007 = vor.u32 %v1005, %v1006
      %vm1008 = vcmp.lt.s32.totalorder %v989, 1
      %vm1009 = vcmp.lt.s32.totalorder %v989, 2
      %vm1010 = vcmp.lt.s32.totalorder %v989, 3
      %vm1011 = vcmp.lt.s32.totalorder %v989, 4
      %v1012 = vsel %vm1008, %v992, %v995
      %v1013 = vsel %vm1011, %v1001, 2102212464
      %v1014 = vsel %vm1010, %v998, %v1013
      %v1015 = vsel %vm1009, %v1012, %v1014
      %v1016 = vsel %vm1008, %v995, %v998
      %v1017 = vsel %vm1011, %v1004, 920167782
      %v1018 = vsel %vm1010, %v1001, %v1017
      %v1019 = vsel %vm1009, %v1016, %v1018
      %v1020 = vsel %vm1008, %v998, %v1001
      %v1021 = vsel %vm1011, %v1007, 1326507024
      %v1022 = vsel %vm1010, %v1004, %v1021
      %v1023 = vsel %vm1009, %v1020, %v1022
      %v1024 = vshll.u32 %v984, 8
      %v1025 = vmul.u32.u64.compose %v1024, %v1023
      %v1026 = vextract.low.u32 %v1025
      %v1027 = vextract.high.u32 %v1025
      %v1028 = vmul.u32.u64.compose %v1024, %v1019
      %v1029 = vextract.low.u32 %v1028
      %v1030 = vextract.high.u32 %v1028
      %v1031 = vmul.u32 %v1024, %v1015
      %v1032 = vadd.s32 %v1027, %v1029
      %vm1033 = vc.u32 %v1027, %v1029
      %v1034 = vadd.s32 %v1030, 1
      %v1035 = vsel %vm1033, %v1034, %v1030
      %v1036 = vadd.s32 %v1031, %v1035
      %v1037 = vadd.s32 %v1036, 536870912
      %v1038 = vshrl.u32 %v1037, 30
      %v1039 = vshll.u32 %v1038, 30
      %v1040 = vsub.s32 %v1036, %v1039
      %vm1041 = vcmp.lt.s32.totalorder %v1040, 0
      %v1042 = vsub.s32 0, %v1040
      %v1043 = vsel %vm1041, %v1042, %v1040
      %v1044 = vclz %v1043
      %v1045 = vsub.s32 %v1044, 2
      %vm1046 = vcmp.gt.s32.totalorder 0, %v1045
      %v1047 = vsel %vm1046, 0, %v1045
      %v1048 = vsub.s32 32, %v1047
      %v1049 = vshll.u32 %v1040, %v1047
      %v1050 = vshrl.u32 %v1032, %v1048
      %v1051 = vor.u32 %v1049, %v1050
      %v1052 = vsub.s32 4294967266, %v1047
      %v1053 = vadd.s32 %v1052, 127
      %v1054 = vshll.u32 %v1053, 23
      %v1055 = vor.u32 4788187, %v1054
      %v1056 = vand.u32 2147483647, %v1055
      %v1058 = vcvt.s32.f32 %v1051
      %v1059 = vmul.f32 %v1058, %v1056
      %v1060 = vxor.u32 %v1059, 2147483648
      %v1061 = vsel %vm978, %v1060, %v1059
      %v1062 = vsub.s32 4, %v1038
      %v1063 = vsel %vm978, %v1062, %v1038
      %v1064 = vsel %vm977, %v962, %v1061
      %v1065 = vsel %vm977, 0, %v1063
      %v1066 = vcosq.f32.pop %v1064
      %v1067 = vsinq.f32.pop %v1064
      %vm1068 = vweird.f32 %v962
      %v1069 = vand.u32 %v1065, 3
      %vm1070 = vcmp.lt.s32.totalorder %v1069, 2
      %vm1071 = vcmp.eq.s32.totalorder %v1069, 0
      %v1072 = vxor.u32 %v1067, 2147483648
      %v1073 = vsel %vm1071, %v1066, %v1072
      %vm1074 = vcmp.eq.s32.totalorder %v1069, 2
      %v1075 = vxor.u32 %v1066, 2147483648
      %v1076 = vsel %vm1074, %v1075, %v1067
      %v1077 = vsel %vm1070, %v1073, %v1076
      %v1078 = vsel %vm1068, nan, %v1077
      %v1079 = vand.u32 2147483647, %v963
      %vm1080 = vcmp.le.f32.partialorder %v1079, 0.7853982
      %vm1081 = vcmp.lt.s32.totalorder %v963, 0
      %v1082 = vand.u32 %v963, 2139095040
      %v1083 = vshrl.u32 %v1082, 23
      %v1084 = vsub.s32 %v1083, 127
      %v1085 = vand.u32 2147483647, %v963
      %v1086 = vand.u32 %v1085, 8388607
      %v1087 = vor.u32 %v1086, 8388608
      %v1088 = vsub.s32 0, %v1087
      %v1089 = vadd.s32 %v1084, 1
      %vm1090 = vcmp.gt.s32.totalorder %v1089, 0
      %v1091 = vsel %vm1090, %v1089, 0
      %v1092 = vshrl.u32 %v1091, 5
      %v1093 = vand.u32 %v1091, 31
      %v1094 = vsub.s32 32, %v1093
      %v1095 = vshrl.u32 683565275, %v1094
      %v1096 = vshll.u32 683565275, %v1093
      %v1097 = vshrl.u32 2475754826, %v1094
      %v1098 = vor.u32 %v1096, %v1097
      %v1099 = vshll.u32 2475754826, %v1093
      %v1100 = vshrl.u32 2131351028, %v1094
      %v1101 = vor.u32 %v1099, %v1100
      %v1102 = vshll.u32 2131351028, %v1093
      %v1103 = vshrl.u32 2102212464, %v1094
      %v1104 = vor.u32 %v1102, %v1103
      %v1105 = vshll.u32 2102212464, %v1093
      %v1106 = vshrl.u32 920167782, %v1094
      %v1107 = vor.u32 %v1105, %v1106
      %v1108 = vshll.u32 920167782, %v1093
      %v1109 = vshrl.u32 1326507024, %v1094
      %v1110 = vor.u32 %v1108, %v1109
      %vm1111 = vcmp.lt.s32.totalorder %v1092, 1
      %vm1112 = vcmp.lt.s32.totalorder %v1092, 2
      %vm1113 = vcmp.lt.s32.totalorder %v1092, 3
      %vm1114 = vcmp.lt.s32.totalorder %v1092, 4
      %v1115 = vsel %vm1111, %v1095, %v1098
      %v1116 = vsel %vm1114, %v1104, 2102212464
      %v1117 = vsel %vm1113, %v1101, %v1116
      %v1118 = vsel %vm1112, %v1115, %v1117
      %v1119 = vsel %vm1111, %v1098, %v1101
      %v1120 = vsel %vm1114, %v1107, 920167782
      %v1121 = vsel %vm1113, %v1104, %v1120
      %v1122 = vsel %vm1112, %v1119, %v1121
      %v1123 = vsel %vm1111, %v1101, %v1104
      %v1124 = vsel %vm1114, %v1110, 1326507024
      %v1125 = vsel %vm1113, %v1107, %v1124
      %v1126 = vsel %vm1112, %v1123, %v1125
      %v1127 = vshll.u32 %v1087, 8
      %v1128 = vmul.u32.u64.compose %v1127, %v1126
      %v1129 = vextract.low.u32 %v1128
      %v1130 = vextract.high.u32 %v1128
      %v1131 = vmul.u32.u64.compose %v1127, %v1122
      %v1132 = vextract.low.u32 %v1131
      %v1133 = vextract.high.u32 %v1131
      %v1134 = vmul.u32 %v1127, %v1118
      %v1135 = vadd.s32 %v1130, %v1132
      %vm1136 = vc.u32 %v1130, %v1132
      %v1137 = vadd.s32 %v1133, 1
      %v1138 = vsel %vm1136, %v1137, %v1133
      %v1139 = vadd.s32 %v1134, %v1138
      %v1140 = vadd.s32 %v1139, 536870912
      %v1141 = vshrl.u32 %v1140, 30
      %v1142 = vshll.u32 %v1141, 30
      %v1143 = vsub.s32 %v1139, %v1142
      %vm1144 = vcmp.lt.s32.totalorder %v1143, 0
      %v1145 = vsub.s32 0, %v1143
      %v1146 = vsel %vm1144, %v1145, %v1143
      %v1147 = vclz %v1146
      %v1148 = vsub.s32 %v1147, 2
      %vm1149 = vcmp.gt.s32.totalorder 0, %v1148
      %v1150 = vsel %vm1149, 0, %v1148
      %v1151 = vsub.s32 32, %v1150
      %v1152 = vshll.u32 %v1143, %v1150
      %v1153 = vshrl.u32 %v1135, %v1151
      %v1154 = vor.u32 %v1152, %v1153
      %v1155 = vsub.s32 4294967266, %v1150
      %v1156 = vadd.s32 %v1155, 127
      %v1157 = vshll.u32 %v1156, 23
      %v1158 = vor.u32 4788187, %v1157
      %v1159 = vand.u32 2147483647, %v1158
      %v1161 = vcvt.s32.f32 %v1154
      %v1162 = vmul.f32 %v1161, %v1159
      %v1163 = vxor.u32 %v1162, 2147483648
      %v1164 = vsel %vm1081, %v1163, %v1162
      %v1165 = vsub.s32 4, %v1141
      %v1166 = vsel %vm1081, %v1165, %v1141
      %v1167 = vsel %vm1080, %v963, %v1164
      %v1168 = vsel %vm1080, 0, %v1166
      %v1169 = vcosq.f32.pop %v1167
      %v1170 = vsinq.f32.pop %v1167
      %vm1171 = vweird.f32 %v963
      %v1172 = vand.u32 %v1168, 3
      %vm1173 = vcmp.lt.s32.totalorder %v1172, 2
      %vm1174 = vcmp.eq.s32.totalorder %v1172, 0
      %v1175 = vxor.u32 %v1170, 2147483648
      %v1176 = vsel %vm1174, %v1169, %v1175
      %vm1177 = vcmp.eq.s32.totalorder %v1172, 2
      %v1178 = vxor.u32 %v1169, 2147483648
      %v1179 = vsel %vm1177, %v1178, %v1170
      %v1180 = vsel %vm1173, %v1176, %v1179
      %v1181 = vsel %vm1171, nan, %v1180
      %v1182 = vmul.f32 %v973, %v1078
      %v1183 = vmul.f32 %v975, %v1181
      %1184 = vset.pattern.permute.xlu0 56
      %1185 = vperm.xlu0 %1184, %v42
      %v1186 = vpop.permute.xlu0 %1185
      %v1188 = vmul.f32 %v1186, %v1182
      %v1189 = vmul.f32 %v1186, %v1183
      %v1190 = vadd.f32 %v908, %v1188
      %v1191 = vadd.f32 %v909, %v1189
      %1192 = vset.pattern.permute.xlu0 64
      %1193 = vperm.xlu0 %1192, %v42
      %v1194 = vpop.permute.xlu0 %1193
      %v1196 = vsub.f32 %v47, %v1194
      %v1197 = vsub.f32 %v51, %v1194
      %1198 = vset.pattern.permute.xlu0 65
      %1199 = vperm.xlu0 %1198, %v42
      %v1200 = vpop.permute.xlu0 %1199
      %v1202 = vsub.f32 %v65, %v1200
      %v1203 = vsub.f32 %v69, %v1200
      %1204 = vset.pattern.permute.xlu0 67
      %1205 = vperm.xlu0 %1204, %v42
      %v1206 = vpop.permute.xlu0 %1205
      %v1208 = vmul.f32 %v1202, %v1206
      %v1209 = vmul.f32 %v1203, %v1206
      %1210 = vset.pattern.permute.xlu0 66
      %1211 = vperm.xlu0 %1210, %v42
      %v1212 = vpop.permute.xlu0 %1211
      %v1214 = vmul.f32 %v1196, %v1212
      %v1215 = vmul.f32 %v1197, %v1212
      %v1216 = vadd.f32 %v1208, %v1214
      %v1217 = vadd.f32 %v1209, %v1215
      %1218 = vset.pattern.permute.xlu0 68
      %1219 = vperm.xlu0 %1218, %v42
      %v1220 = vpop.permute.xlu0 %1219
      %v1222 = vmul.f32 %v1202, %v1220
      %v1223 = vmul.f32 %v1203, %v1220
      %1224 = vset.pattern.permute.xlu0 69
      %1225 = vperm.xlu0 %1224, %v42
      %v1226 = vpop.permute.xlu0 %1225
      %v1228 = vmul.f32 %v1196, %v1226
      %v1229 = vmul.f32 %v1197, %v1226
      %v1230 = vsub.f32 %v1222, %v1228
      %v1231 = vsub.f32 %v1223, %v1229
      %1232 = vset.pattern.permute.xlu0 70
      %1233 = vperm.xlu0 %1232, %v42
      %v1234 = vpop.permute.xlu0 %1233
      %v1236 = vmul.f32 %v1202, %v1234
      %v1237 = vmul.f32 %v1203, %v1234
      %1238 = vset.pattern.permute.xlu0 71
      %1239 = vperm.xlu0 %1238, %v42
      %v1240 = vpop.permute.xlu0 %1239
      %v1242 = vmul.f32 %v1196, %v1240
      %v1243 = vmul.f32 %v1197, %v1240
      %v1244 = vsub.f32 %v1236, %v1242
      %v1245 = vsub.f32 %v1237, %v1243
      %v1246 = vmul.f32 %v1216, %v1216
      %v1247 = vmul.f32 %v1217, %v1217
      %v1248 = vmul.f32 %v1230, %v1230
      %v1249 = vmul.f32 %v1231, %v1231
      %v1250 = vadd.f32 %v1246, %v1248
      %v1251 = vadd.f32 %v1247, %v1249
      %v1252 = vmul.f32 %v1250, -0.5
      %v1253 = vmul.f32 %v1251, -0.5
      %v1254 = vmul.f32 %v1252, 1.442695
      %v1255 = vpow.pop %v1254
      %v1256 = vmul.f32 %v1253, 1.442695
      %v1257 = vpow.pop %v1256
      %v1258 = vand.u32 2147483647, %v1244
      %vm1259 = vcmp.le.f32.partialorder %v1258, 0.7853982
      %vm1260 = vcmp.lt.s32.totalorder %v1244, 0
      %v1261 = vand.u32 %v1244, 2139095040
      %v1262 = vshrl.u32 %v1261, 23
      %v1263 = vsub.s32 %v1262, 127
      %v1264 = vand.u32 2147483647, %v1244
      %v1265 = vand.u32 %v1264, 8388607
      %v1266 = vor.u32 %v1265, 8388608
      %v1267 = vsub.s32 0, %v1266
      %v1268 = vadd.s32 %v1263, 1
      %vm1269 = vcmp.gt.s32.totalorder %v1268, 0
      %v1270 = vsel %vm1269, %v1268, 0
      %v1271 = vshrl.u32 %v1270, 5
      %v1272 = vand.u32 %v1270, 31
      %v1273 = vsub.s32 32, %v1272
      %v1274 = vshrl.u32 683565275, %v1273
      %v1275 = vshll.u32 683565275, %v1272
      %v1276 = vshrl.u32 2475754826, %v1273
      %v1277 = vor.u32 %v1275, %v1276
      %v1278 = vshll.u32 2475754826, %v1272
      %v1279 = vshrl.u32 2131351028, %v1273
      %v1280 = vor.u32 %v1278, %v1279
      %v1281 = vshll.u32 2131351028, %v1272
      %v1282 = vshrl.u32 2102212464, %v1273
      %v1283 = vor.u32 %v1281, %v1282
      %v1284 = vshll.u32 2102212464, %v1272
      %v1285 = vshrl.u32 920167782, %v1273
      %v1286 = vor.u32 %v1284, %v1285
      %v1287 = vshll.u32 920167782, %v1272
      %v1288 = vshrl.u32 1326507024, %v1273
      %v1289 = vor.u32 %v1287, %v1288
      %vm1290 = vcmp.lt.s32.totalorder %v1271, 1
      %vm1291 = vcmp.lt.s32.totalorder %v1271, 2
      %vm1292 = vcmp.lt.s32.totalorder %v1271, 3
      %vm1293 = vcmp.lt.s32.totalorder %v1271, 4
      %v1294 = vsel %vm1290, %v1274, %v1277
      %v1295 = vsel %vm1293, %v1283, 2102212464
      %v1296 = vsel %vm1292, %v1280, %v1295
      %v1297 = vsel %vm1291, %v1294, %v1296
      %v1298 = vsel %vm1290, %v1277, %v1280
      %v1299 = vsel %vm1293, %v1286, 920167782
      %v1300 = vsel %vm1292, %v1283, %v1299
      %v1301 = vsel %vm1291, %v1298, %v1300
      %v1302 = vsel %vm1290, %v1280, %v1283
      %v1303 = vsel %vm1293, %v1289, 1326507024
      %v1304 = vsel %vm1292, %v1286, %v1303
      %v1305 = vsel %vm1291, %v1302, %v1304
      %v1306 = vshll.u32 %v1266, 8
      %v1307 = vmul.u32.u64.compose %v1306, %v1305
      %v1308 = vextract.low.u32 %v1307
      %v1309 = vextract.high.u32 %v1307
      %v1310 = vmul.u32.u64.compose %v1306, %v1301
      %v1311 = vextract.low.u32 %v1310
      %v1312 = vextract.high.u32 %v1310
      %v1313 = vmul.u32 %v1306, %v1297
      %v1314 = vadd.s32 %v1309, %v1311
      %vm1315 = vc.u32 %v1309, %v1311
      %v1316 = vadd.s32 %v1312, 1
      %v1317 = vsel %vm1315, %v1316, %v1312
      %v1318 = vadd.s32 %v1313, %v1317
      %v1319 = vadd.s32 %v1318, 536870912
      %v1320 = vshrl.u32 %v1319, 30
      %v1321 = vshll.u32 %v1320, 30
      %v1322 = vsub.s32 %v1318, %v1321
      %vm1323 = vcmp.lt.s32.totalorder %v1322, 0
      %v1324 = vsub.s32 0, %v1322
      %v1325 = vsel %vm1323, %v1324, %v1322
      %v1326 = vclz %v1325
      %v1327 = vsub.s32 %v1326, 2
      %vm1328 = vcmp.gt.s32.totalorder 0, %v1327
      %v1329 = vsel %vm1328, 0, %v1327
      %v1330 = vsub.s32 32, %v1329
      %v1331 = vshll.u32 %v1322, %v1329
      %v1332 = vshrl.u32 %v1314, %v1330
      %v1333 = vor.u32 %v1331, %v1332
      %v1334 = vsub.s32 4294967266, %v1329
      %v1335 = vadd.s32 %v1334, 127
      %v1336 = vshll.u32 %v1335, 23
      %v1337 = vor.u32 4788187, %v1336
      %v1338 = vand.u32 2147483647, %v1337
      %v1340 = vcvt.s32.f32 %v1333
      %v1341 = vmul.f32 %v1340, %v1338
      %v1342 = vxor.u32 %v1341, 2147483648
      %v1343 = vsel %vm1260, %v1342, %v1341
      %v1344 = vsub.s32 4, %v1320
      %v1345 = vsel %vm1260, %v1344, %v1320
      %v1346 = vsel %vm1259, %v1244, %v1343
      %v1347 = vsel %vm1259, 0, %v1345
      %v1348 = vcosq.f32.pop %v1346
      %v1349 = vsinq.f32.pop %v1346
      %vm1350 = vweird.f32 %v1244
      %v1351 = vand.u32 %v1347, 3
      %vm1352 = vcmp.lt.s32.totalorder %v1351, 2
      %vm1353 = vcmp.eq.s32.totalorder %v1351, 0
      %v1354 = vxor.u32 %v1349, 2147483648
      %v1355 = vsel %vm1353, %v1348, %v1354
      %vm1356 = vcmp.eq.s32.totalorder %v1351, 2
      %v1357 = vxor.u32 %v1348, 2147483648
      %v1358 = vsel %vm1356, %v1357, %v1349
      %v1359 = vsel %vm1352, %v1355, %v1358
      %v1360 = vsel %vm1350, nan, %v1359
      %v1361 = vand.u32 2147483647, %v1245
      %vm1362 = vcmp.le.f32.partialorder %v1361, 0.7853982
      %vm1363 = vcmp.lt.s32.totalorder %v1245, 0
      %v1364 = vand.u32 %v1245, 2139095040
      %v1365 = vshrl.u32 %v1364, 23
      %v1366 = vsub.s32 %v1365, 127
      %v1367 = vand.u32 2147483647, %v1245
      %v1368 = vand.u32 %v1367, 8388607
      %v1369 = vor.u32 %v1368, 8388608
      %v1370 = vsub.s32 0, %v1369
      %v1371 = vadd.s32 %v1366, 1
      %vm1372 = vcmp.gt.s32.totalorder %v1371, 0
      %v1373 = vsel %vm1372, %v1371, 0
      %v1374 = vshrl.u32 %v1373, 5
      %v1375 = vand.u32 %v1373, 31
      %v1376 = vsub.s32 32, %v1375
      %v1377 = vshrl.u32 683565275, %v1376
      %v1378 = vshll.u32 683565275, %v1375
      %v1379 = vshrl.u32 2475754826, %v1376
      %v1380 = vor.u32 %v1378, %v1379
      %v1381 = vshll.u32 2475754826, %v1375
      %v1382 = vshrl.u32 2131351028, %v1376
      %v1383 = vor.u32 %v1381, %v1382
      %v1384 = vshll.u32 2131351028, %v1375
      %v1385 = vshrl.u32 2102212464, %v1376
      %v1386 = vor.u32 %v1384, %v1385
      %v1387 = vshll.u32 2102212464, %v1375
      %v1388 = vshrl.u32 920167782, %v1376
      %v1389 = vor.u32 %v1387, %v1388
      %v1390 = vshll.u32 920167782, %v1375
      %v1391 = vshrl.u32 1326507024, %v1376
      %v1392 = vor.u32 %v1390, %v1391
      %vm1393 = vcmp.lt.s32.totalorder %v1374, 1
      %vm1394 = vcmp.lt.s32.totalorder %v1374, 2
      %vm1395 = vcmp.lt.s32.totalorder %v1374, 3
      %vm1396 = vcmp.lt.s32.totalorder %v1374, 4
      %v1397 = vsel %vm1393, %v1377, %v1380
      %v1398 = vsel %vm1396, %v1386, 2102212464
      %v1399 = vsel %vm1395, %v1383, %v1398
      %v1400 = vsel %vm1394, %v1397, %v1399
      %v1401 = vsel %vm1393, %v1380, %v1383
      %v1402 = vsel %vm1396, %v1389, 920167782
      %v1403 = vsel %vm1395, %v1386, %v1402
      %v1404 = vsel %vm1394, %v1401, %v1403
      %v1405 = vsel %vm1393, %v1383, %v1386
      %v1406 = vsel %vm1396, %v1392, 1326507024
      %v1407 = vsel %vm1395, %v1389, %v1406
      %v1408 = vsel %vm1394, %v1405, %v1407
      %v1409 = vshll.u32 %v1369, 8
      %v1410 = vmul.u32.u64.compose %v1409, %v1408
      %v1411 = vextract.low.u32 %v1410
      %v1412 = vextract.high.u32 %v1410
      %v1413 = vmul.u32.u64.compose %v1409, %v1404
      %v1414 = vextract.low.u32 %v1413
      %v1415 = vextract.high.u32 %v1413
      %v1416 = vmul.u32 %v1409, %v1400
      %v1417 = vadd.s32 %v1412, %v1414
      %vm1418 = vc.u32 %v1412, %v1414
      %v1419 = vadd.s32 %v1415, 1
      %v1420 = vsel %vm1418, %v1419, %v1415
      %v1421 = vadd.s32 %v1416, %v1420
      %v1422 = vadd.s32 %v1421, 536870912
      %v1423 = vshrl.u32 %v1422, 30
      %v1424 = vshll.u32 %v1423, 30
      %v1425 = vsub.s32 %v1421, %v1424
      %vm1426 = vcmp.lt.s32.totalorder %v1425, 0
      %v1427 = vsub.s32 0, %v1425
      %v1428 = vsel %vm1426, %v1427, %v1425
      %v1429 = vclz %v1428
      %v1430 = vsub.s32 %v1429, 2
      %vm1431 = vcmp.gt.s32.totalorder 0, %v1430
      %v1432 = vsel %vm1431, 0, %v1430
      %v1433 = vsub.s32 32, %v1432
      %v1434 = vshll.u32 %v1425, %v1432
      %v1435 = vshrl.u32 %v1417, %v1433
      %v1436 = vor.u32 %v1434, %v1435
      %v1437 = vsub.s32 4294967266, %v1432
      %v1438 = vadd.s32 %v1437, 127
      %v1439 = vshll.u32 %v1438, 23
      %v1440 = vor.u32 4788187, %v1439
      %v1441 = vand.u32 2147483647, %v1440
      %v1443 = vcvt.s32.f32 %v1436
      %v1444 = vmul.f32 %v1443, %v1441
      %v1445 = vxor.u32 %v1444, 2147483648
      %v1446 = vsel %vm1363, %v1445, %v1444
      %v1447 = vsub.s32 4, %v1423
      %v1448 = vsel %vm1363, %v1447, %v1423
      %v1449 = vsel %vm1362, %v1245, %v1446
      %v1450 = vsel %vm1362, 0, %v1448
      %v1451 = vcosq.f32.pop %v1449
      %v1452 = vsinq.f32.pop %v1449
      %vm1453 = vweird.f32 %v1245
      %v1454 = vand.u32 %v1450, 3
      %vm1455 = vcmp.lt.s32.totalorder %v1454, 2
      %vm1456 = vcmp.eq.s32.totalorder %v1454, 0
      %v1457 = vxor.u32 %v1452, 2147483648
      %v1458 = vsel %vm1456, %v1451, %v1457
      %vm1459 = vcmp.eq.s32.totalorder %v1454, 2
      %v1460 = vxor.u32 %v1451, 2147483648
      %v1461 = vsel %vm1459, %v1460, %v1452
      %v1462 = vsel %vm1455, %v1458, %v1461
      %v1463 = vsel %vm1453, nan, %v1462
      %v1464 = vmul.f32 %v1255, %v1360
      %v1465 = vmul.f32 %v1257, %v1463
      %1466 = vset.pattern.permute.xlu0 72
      %1467 = vperm.xlu0 %1466, %v42
      %v1468 = vpop.permute.xlu0 %1467
      %v1470 = vmul.f32 %v1468, %v1464
      %v1471 = vmul.f32 %v1468, %v1465
      %v1472 = vadd.f32 %v1190, %v1470
      %v1473 = vadd.f32 %v1191, %v1471
      %1474 = vset.pattern.permute.xlu0 80
      %1475 = vperm.xlu0 %1474, %v42
      %v1476 = vpop.permute.xlu0 %1475
      %v1478 = vsub.f32 %v47, %v1476
      %v1479 = vsub.f32 %v51, %v1476
      %1480 = vset.pattern.permute.xlu0 81
      %1481 = vperm.xlu0 %1480, %v42
      %v1482 = vpop.permute.xlu0 %1481
      %v1484 = vsub.f32 %v65, %v1482
      %v1485 = vsub.f32 %v69, %v1482
      %1486 = vset.pattern.permute.xlu0 83
      %1487 = vperm.xlu0 %1486, %v42
      %v1488 = vpop.permute.xlu0 %1487
      %v1490 = vmul.f32 %v1484, %v1488
      %v1491 = vmul.f32 %v1485, %v1488
      %1492 = vset.pattern.permute.xlu0 82
      %1493 = vperm.xlu0 %1492, %v42
      %v1494 = vpop.permute.xlu0 %1493
      %v1496 = vmul.f32 %v1478, %v1494
      %v1497 = vmul.f32 %v1479, %v1494
      %v1498 = vadd.f32 %v1490, %v1496
      %v1499 = vadd.f32 %v1491, %v1497
      %1500 = vset.pattern.permute.xlu0 84
      %1501 = vperm.xlu0 %1500, %v42
      %v1502 = vpop.permute.xlu0 %1501
      %v1504 = vmul.f32 %v1484, %v1502
      %v1505 = vmul.f32 %v1485, %v1502
      %1506 = vset.pattern.permute.xlu0 85
      %1507 = vperm.xlu0 %1506, %v42
      %v1508 = vpop.permute.xlu0 %1507
      %v1510 = vmul.f32 %v1478, %v1508
      %v1511 = vmul.f32 %v1479, %v1508
      %v1512 = vsub.f32 %v1504, %v1510
      %v1513 = vsub.f32 %v1505, %v1511
      %1514 = vset.pattern.permute.xlu0 86
      %1515 = vperm.xlu0 %1514, %v42
      %v1516 = vpop.permute.xlu0 %1515
      %v1518 = vmul.f32 %v1484, %v1516
      %v1519 = vmul.f32 %v1485, %v1516
      %1520 = vset.pattern.permute.xlu0 87
      %1521 = vperm.xlu0 %1520, %v42
      %v1522 = vpop.permute.xlu0 %1521
      %v1524 = vmul.f32 %v1478, %v1522
      %v1525 = vmul.f32 %v1479, %v1522
      %v1526 = vsub.f32 %v1518, %v1524
      %v1527 = vsub.f32 %v1519, %v1525
      %v1528 = vmul.f32 %v1498, %v1498
      %v1529 = vmul.f32 %v1499, %v1499
      %v1530 = vmul.f32 %v1512, %v1512
      %v1531 = vmul.f32 %v1513, %v1513
      %v1532 = vadd.f32 %v1528, %v1530
      %v1533 = vadd.f32 %v1529, %v1531
      %v1534 = vmul.f32 %v1532, -0.5
      %v1535 = vmul.f32 %v1533, -0.5
      %v1536 = vmul.f32 %v1534, 1.442695
      %v1537 = vpow.pop %v1536
      %v1538 = vmul.f32 %v1535, 1.442695
      %v1539 = vpow.pop %v1538
      %v1540 = vand.u32 2147483647, %v1526
      %vm1541 = vcmp.le.f32.partialorder %v1540, 0.7853982
      %vm1542 = vcmp.lt.s32.totalorder %v1526, 0
      %v1543 = vand.u32 %v1526, 2139095040
      %v1544 = vshrl.u32 %v1543, 23
      %v1545 = vsub.s32 %v1544, 127
      %v1546 = vand.u32 2147483647, %v1526
      %v1547 = vand.u32 %v1546, 8388607
      %v1548 = vor.u32 %v1547, 8388608
      %v1549 = vsub.s32 0, %v1548
      %v1550 = vadd.s32 %v1545, 1
      %vm1551 = vcmp.gt.s32.totalorder %v1550, 0
      %v1552 = vsel %vm1551, %v1550, 0
      %v1553 = vshrl.u32 %v1552, 5
      %v1554 = vand.u32 %v1552, 31
      %v1555 = vsub.s32 32, %v1554
      %v1556 = vshrl.u32 683565275, %v1555
      %v1557 = vshll.u32 683565275, %v1554
      %v1558 = vshrl.u32 2475754826, %v1555
      %v1559 = vor.u32 %v1557, %v1558
      %v1560 = vshll.u32 2475754826, %v1554
      %v1561 = vshrl.u32 2131351028, %v1555
      %v1562 = vor.u32 %v1560, %v1561
      %v1563 = vshll.u32 2131351028, %v1554
      %v1564 = vshrl.u32 2102212464, %v1555
      %v1565 = vor.u32 %v1563, %v1564
      %v1566 = vshll.u32 2102212464, %v1554
      %v1567 = vshrl.u32 920167782, %v1555
      %v1568 = vor.u32 %v1566, %v1567
      %v1569 = vshll.u32 920167782, %v1554
      %v1570 = vshrl.u32 1326507024, %v1555
      %v1571 = vor.u32 %v1569, %v1570
      %vm1572 = vcmp.lt.s32.totalorder %v1553, 1
      %vm1573 = vcmp.lt.s32.totalorder %v1553, 2
      %vm1574 = vcmp.lt.s32.totalorder %v1553, 3
      %vm1575 = vcmp.lt.s32.totalorder %v1553, 4
      %v1576 = vsel %vm1572, %v1556, %v1559
      %v1577 = vsel %vm1575, %v1565, 2102212464
      %v1578 = vsel %vm1574, %v1562, %v1577
      %v1579 = vsel %vm1573, %v1576, %v1578
      %v1580 = vsel %vm1572, %v1559, %v1562
      %v1581 = vsel %vm1575, %v1568, 920167782
      %v1582 = vsel %vm1574, %v1565, %v1581
      %v1583 = vsel %vm1573, %v1580, %v1582
      %v1584 = vsel %vm1572, %v1562, %v1565
      %v1585 = vsel %vm1575, %v1571, 1326507024
      %v1586 = vsel %vm1574, %v1568, %v1585
      %v1587 = vsel %vm1573, %v1584, %v1586
      %v1588 = vshll.u32 %v1548, 8
      %v1589 = vmul.u32.u64.compose %v1588, %v1587
      %v1590 = vextract.low.u32 %v1589
      %v1591 = vextract.high.u32 %v1589
      %v1592 = vmul.u32.u64.compose %v1588, %v1583
      %v1593 = vextract.low.u32 %v1592
      %v1594 = vextract.high.u32 %v1592
      %v1595 = vmul.u32 %v1588, %v1579
      %v1596 = vadd.s32 %v1591, %v1593
      %vm1597 = vc.u32 %v1591, %v1593
      %v1598 = vadd.s32 %v1594, 1
      %v1599 = vsel %vm1597, %v1598, %v1594
      %v1600 = vadd.s32 %v1595, %v1599
      %v1601 = vadd.s32 %v1600, 536870912
      %v1602 = vshrl.u32 %v1601, 30
      %v1603 = vshll.u32 %v1602, 30
      %v1604 = vsub.s32 %v1600, %v1603
      %vm1605 = vcmp.lt.s32.totalorder %v1604, 0
      %v1606 = vsub.s32 0, %v1604
      %v1607 = vsel %vm1605, %v1606, %v1604
      %v1608 = vclz %v1607
      %v1609 = vsub.s32 %v1608, 2
      %vm1610 = vcmp.gt.s32.totalorder 0, %v1609
      %v1611 = vsel %vm1610, 0, %v1609
      %v1612 = vsub.s32 32, %v1611
      %v1613 = vshll.u32 %v1604, %v1611
      %v1614 = vshrl.u32 %v1596, %v1612
      %v1615 = vor.u32 %v1613, %v1614
      %v1616 = vsub.s32 4294967266, %v1611
      %v1617 = vadd.s32 %v1616, 127
      %v1618 = vshll.u32 %v1617, 23
      %v1619 = vor.u32 4788187, %v1618
      %v1620 = vand.u32 2147483647, %v1619
      %v1622 = vcvt.s32.f32 %v1615
      %v1623 = vmul.f32 %v1622, %v1620
      %v1624 = vxor.u32 %v1623, 2147483648
      %v1625 = vsel %vm1542, %v1624, %v1623
      %v1626 = vsub.s32 4, %v1602
      %v1627 = vsel %vm1542, %v1626, %v1602
      %v1628 = vsel %vm1541, %v1526, %v1625
      %v1629 = vsel %vm1541, 0, %v1627
      %v1630 = vcosq.f32.pop %v1628
      %v1631 = vsinq.f32.pop %v1628
      %vm1632 = vweird.f32 %v1526
      %v1633 = vand.u32 %v1629, 3
      %vm1634 = vcmp.lt.s32.totalorder %v1633, 2
      %vm1635 = vcmp.eq.s32.totalorder %v1633, 0
      %v1636 = vxor.u32 %v1631, 2147483648
      %v1637 = vsel %vm1635, %v1630, %v1636
      %vm1638 = vcmp.eq.s32.totalorder %v1633, 2
      %v1639 = vxor.u32 %v1630, 2147483648
      %v1640 = vsel %vm1638, %v1639, %v1631
      %v1641 = vsel %vm1634, %v1637, %v1640
      %v1642 = vsel %vm1632, nan, %v1641
      %v1643 = vand.u32 2147483647, %v1527
      %vm1644 = vcmp.le.f32.partialorder %v1643, 0.7853982
      %vm1645 = vcmp.lt.s32.totalorder %v1527, 0
      %v1646 = vand.u32 %v1527, 2139095040
      %v1647 = vshrl.u32 %v1646, 23
      %v1648 = vsub.s32 %v1647, 127
      %v1649 = vand.u32 2147483647, %v1527
      %v1650 = vand.u32 %v1649, 8388607
      %v1651 = vor.u32 %v1650, 8388608
      %v1652 = vsub.s32 0, %v1651
      %v1653 = vadd.s32 %v1648, 1
      %vm1654 = vcmp.gt.s32.totalorder %v1653, 0
      %v1655 = vsel %vm1654, %v1653, 0
      %v1656 = vshrl.u32 %v1655, 5
      %v1657 = vand.u32 %v1655, 31
      %v1658 = vsub.s32 32, %v1657
      %v1659 = vshrl.u32 683565275, %v1658
      %v1660 = vshll.u32 683565275, %v1657
      %v1661 = vshrl.u32 2475754826, %v1658
      %v1662 = vor.u32 %v1660, %v1661
      %v1663 = vshll.u32 2475754826, %v1657
      %v1664 = vshrl.u32 2131351028, %v1658
      %v1665 = vor.u32 %v1663, %v1664
      %v1666 = vshll.u32 2131351028, %v1657
      %v1667 = vshrl.u32 2102212464, %v1658
      %v1668 = vor.u32 %v1666, %v1667
      %v1669 = vshll.u32 2102212464, %v1657
      %v1670 = vshrl.u32 920167782, %v1658
      %v1671 = vor.u32 %v1669, %v1670
      %v1672 = vshll.u32 920167782, %v1657
      %v1673 = vshrl.u32 1326507024, %v1658
      %v1674 = vor.u32 %v1672, %v1673
      %vm1675 = vcmp.lt.s32.totalorder %v1656, 1
      %vm1676 = vcmp.lt.s32.totalorder %v1656, 2
      %vm1677 = vcmp.lt.s32.totalorder %v1656, 3
      %vm1678 = vcmp.lt.s32.totalorder %v1656, 4
      %v1679 = vsel %vm1675, %v1659, %v1662
      %v1680 = vsel %vm1678, %v1668, 2102212464
      %v1681 = vsel %vm1677, %v1665, %v1680
      %v1682 = vsel %vm1676, %v1679, %v1681
      %v1683 = vsel %vm1675, %v1662, %v1665
      %v1684 = vsel %vm1678, %v1671, 920167782
      %v1685 = vsel %vm1677, %v1668, %v1684
      %v1686 = vsel %vm1676, %v1683, %v1685
      %v1687 = vsel %vm1675, %v1665, %v1668
      %v1688 = vsel %vm1678, %v1674, 1326507024
      %v1689 = vsel %vm1677, %v1671, %v1688
      %v1690 = vsel %vm1676, %v1687, %v1689
      %v1691 = vshll.u32 %v1651, 8
      %v1692 = vmul.u32.u64.compose %v1691, %v1690
      %v1693 = vextract.low.u32 %v1692
      %v1694 = vextract.high.u32 %v1692
      %v1695 = vmul.u32.u64.compose %v1691, %v1686
      %v1696 = vextract.low.u32 %v1695
      %v1697 = vextract.high.u32 %v1695
      %v1698 = vmul.u32 %v1691, %v1682
      %v1699 = vadd.s32 %v1694, %v1696
      %vm1700 = vc.u32 %v1694, %v1696
      %v1701 = vadd.s32 %v1697, 1
      %v1702 = vsel %vm1700, %v1701, %v1697
      %v1703 = vadd.s32 %v1698, %v1702
      %v1704 = vadd.s32 %v1703, 536870912
      %v1705 = vshrl.u32 %v1704, 30
      %v1706 = vshll.u32 %v1705, 30
      %v1707 = vsub.s32 %v1703, %v1706
      %vm1708 = vcmp.lt.s32.totalorder %v1707, 0
      %v1709 = vsub.s32 0, %v1707
      %v1710 = vsel %vm1708, %v1709, %v1707
      %v1711 = vclz %v1710
      %v1712 = vsub.s32 %v1711, 2
      %vm1713 = vcmp.gt.s32.totalorder 0, %v1712
      %v1714 = vsel %vm1713, 0, %v1712
      %v1715 = vsub.s32 32, %v1714
      %v1716 = vshll.u32 %v1707, %v1714
      %v1717 = vshrl.u32 %v1699, %v1715
      %v1718 = vor.u32 %v1716, %v1717
      %v1719 = vsub.s32 4294967266, %v1714
      %v1720 = vadd.s32 %v1719, 127
      %v1721 = vshll.u32 %v1720, 23
      %v1722 = vor.u32 4788187, %v1721
      %v1723 = vand.u32 2147483647, %v1722
      %v1725 = vcvt.s32.f32 %v1718
      %v1726 = vmul.f32 %v1725, %v1723
      %v1727 = vxor.u32 %v1726, 2147483648
      %v1728 = vsel %vm1645, %v1727, %v1726
      %v1729 = vsub.s32 4, %v1705
      %v1730 = vsel %vm1645, %v1729, %v1705
      %v1731 = vsel %vm1644, %v1527, %v1728
      %v1732 = vsel %vm1644, 0, %v1730
      %v1733 = vcosq.f32.pop %v1731
      %v1734 = vsinq.f32.pop %v1731
      %vm1735 = vweird.f32 %v1527
      %v1736 = vand.u32 %v1732, 3
      %vm1737 = vcmp.lt.s32.totalorder %v1736, 2
      %vm1738 = vcmp.eq.s32.totalorder %v1736, 0
      %v1739 = vxor.u32 %v1734, 2147483648
      %v1740 = vsel %vm1738, %v1733, %v1739
      %vm1741 = vcmp.eq.s32.totalorder %v1736, 2
      %v1742 = vxor.u32 %v1733, 2147483648
      %v1743 = vsel %vm1741, %v1742, %v1734
      %v1744 = vsel %vm1737, %v1740, %v1743
      %v1745 = vsel %vm1735, nan, %v1744
      %v1746 = vmul.f32 %v1537, %v1642
      %v1747 = vmul.f32 %v1539, %v1745
      %1748 = vset.pattern.permute.xlu0 88
      %1749 = vperm.xlu0 %1748, %v42
      %v1750 = vpop.permute.xlu0 %1749
      %v1752 = vmul.f32 %v1750, %v1746
      %v1753 = vmul.f32 %v1750, %v1747
      %v1754 = vadd.f32 %v1472, %v1752
      %v1755 = vadd.f32 %v1473, %v1753
      %1756 = vset.pattern.permute.xlu0 96
      %1757 = vperm.xlu0 %1756, %v42
      %v1758 = vpop.permute.xlu0 %1757
      %v1760 = vsub.f32 %v47, %v1758
      %v1761 = vsub.f32 %v51, %v1758
      %1762 = vset.pattern.permute.xlu0 97
      %1763 = vperm.xlu0 %1762, %v42
      %v1764 = vpop.permute.xlu0 %1763
      %v1766 = vsub.f32 %v65, %v1764
      %v1767 = vsub.f32 %v69, %v1764
      %1768 = vset.pattern.permute.xlu0 99
      %1769 = vperm.xlu0 %1768, %v42
      %v1770 = vpop.permute.xlu0 %1769
      %v1772 = vmul.f32 %v1766, %v1770
      %v1773 = vmul.f32 %v1767, %v1770
      %1774 = vset.pattern.permute.xlu0 98
      %1775 = vperm.xlu0 %1774, %v42
      %v1776 = vpop.permute.xlu0 %1775
      %v1778 = vmul.f32 %v1760, %v1776
      %v1779 = vmul.f32 %v1761, %v1776
      %v1780 = vadd.f32 %v1772, %v1778
      %v1781 = vadd.f32 %v1773, %v1779
      %1782 = vset.pattern.permute.xlu0 100
      %1783 = vperm.xlu0 %1782, %v42
      %v1784 = vpop.permute.xlu0 %1783
      %v1786 = vmul.f32 %v1766, %v1784
      %v1787 = vmul.f32 %v1767, %v1784
      %1788 = vset.pattern.permute.xlu0 101
      %1789 = vperm.xlu0 %1788, %v42
      %v1790 = vpop.permute.xlu0 %1789
      %v1792 = vmul.f32 %v1760, %v1790
      %v1793 = vmul.f32 %v1761, %v1790
      %v1794 = vsub.f32 %v1786, %v1792
      %v1795 = vsub.f32 %v1787, %v1793
      %1796 = vset.pattern.permute.xlu0 102
      %1797 = vperm.xlu0 %1796, %v42
      %v1798 = vpop.permute.xlu0 %1797
      %v1800 = vmul.f32 %v1766, %v1798
      %v1801 = vmul.f32 %v1767, %v1798
      %1802 = vset.pattern.permute.xlu0 103
      %1803 = vperm.xlu0 %1802, %v42
      %v1804 = vpop.permute.xlu0 %1803
      %v1806 = vmul.f32 %v1760, %v1804
      %v1807 = vmul.f32 %v1761, %v1804
      %v1808 = vsub.f32 %v1800, %v1806
      %v1809 = vsub.f32 %v1801, %v1807
      %v1810 = vmul.f32 %v1780, %v1780
      %v1811 = vmul.f32 %v1781, %v1781
      %v1812 = vmul.f32 %v1794, %v1794
      %v1813 = vmul.f32 %v1795, %v1795
      %v1814 = vadd.f32 %v1810, %v1812
      %v1815 = vadd.f32 %v1811, %v1813
      %v1816 = vmul.f32 %v1814, -0.5
      %v1817 = vmul.f32 %v1815, -0.5
      %v1818 = vmul.f32 %v1816, 1.442695
      %v1819 = vpow.pop %v1818
      %v1820 = vmul.f32 %v1817, 1.442695
      %v1821 = vpow.pop %v1820
      %v1822 = vand.u32 2147483647, %v1808
      %vm1823 = vcmp.le.f32.partialorder %v1822, 0.7853982
      %vm1824 = vcmp.lt.s32.totalorder %v1808, 0
      %v1825 = vand.u32 %v1808, 2139095040
      %v1826 = vshrl.u32 %v1825, 23
      %v1827 = vsub.s32 %v1826, 127
      %v1828 = vand.u32 2147483647, %v1808
      %v1829 = vand.u32 %v1828, 8388607
      %v1830 = vor.u32 %v1829, 8388608
      %v1831 = vsub.s32 0, %v1830
      %v1832 = vadd.s32 %v1827, 1
      %vm1833 = vcmp.gt.s32.totalorder %v1832, 0
      %v1834 = vsel %vm1833, %v1832, 0
      %v1835 = vshrl.u32 %v1834, 5
      %v1836 = vand.u32 %v1834, 31
      %v1837 = vsub.s32 32, %v1836
      %v1838 = vshrl.u32 683565275, %v1837
      %v1839 = vshll.u32 683565275, %v1836
      %v1840 = vshrl.u32 2475754826, %v1837
      %v1841 = vor.u32 %v1839, %v1840
      %v1842 = vshll.u32 2475754826, %v1836
      %v1843 = vshrl.u32 2131351028, %v1837
      %v1844 = vor.u32 %v1842, %v1843
      %v1845 = vshll.u32 2131351028, %v1836
      %v1846 = vshrl.u32 2102212464, %v1837
      %v1847 = vor.u32 %v1845, %v1846
      %v1848 = vshll.u32 2102212464, %v1836
      %v1849 = vshrl.u32 920167782, %v1837
      %v1850 = vor.u32 %v1848, %v1849
      %v1851 = vshll.u32 920167782, %v1836
      %v1852 = vshrl.u32 1326507024, %v1837
      %v1853 = vor.u32 %v1851, %v1852
      %vm1854 = vcmp.lt.s32.totalorder %v1835, 1
      %vm1855 = vcmp.lt.s32.totalorder %v1835, 2
      %vm1856 = vcmp.lt.s32.totalorder %v1835, 3
      %vm1857 = vcmp.lt.s32.totalorder %v1835, 4
      %v1858 = vsel %vm1854, %v1838, %v1841
      %v1859 = vsel %vm1857, %v1847, 2102212464
      %v1860 = vsel %vm1856, %v1844, %v1859
      %v1861 = vsel %vm1855, %v1858, %v1860
      %v1862 = vsel %vm1854, %v1841, %v1844
      %v1863 = vsel %vm1857, %v1850, 920167782
      %v1864 = vsel %vm1856, %v1847, %v1863
      %v1865 = vsel %vm1855, %v1862, %v1864
      %v1866 = vsel %vm1854, %v1844, %v1847
      %v1867 = vsel %vm1857, %v1853, 1326507024
      %v1868 = vsel %vm1856, %v1850, %v1867
      %v1869 = vsel %vm1855, %v1866, %v1868
      %v1870 = vshll.u32 %v1830, 8
      %v1871 = vmul.u32.u64.compose %v1870, %v1869
      %v1872 = vextract.low.u32 %v1871
      %v1873 = vextract.high.u32 %v1871
      %v1874 = vmul.u32.u64.compose %v1870, %v1865
      %v1875 = vextract.low.u32 %v1874
      %v1876 = vextract.high.u32 %v1874
      %v1877 = vmul.u32 %v1870, %v1861
      %v1878 = vadd.s32 %v1873, %v1875
      %vm1879 = vc.u32 %v1873, %v1875
      %v1880 = vadd.s32 %v1876, 1
      %v1881 = vsel %vm1879, %v1880, %v1876
      %v1882 = vadd.s32 %v1877, %v1881
      %v1883 = vadd.s32 %v1882, 536870912
      %v1884 = vshrl.u32 %v1883, 30
      %v1885 = vshll.u32 %v1884, 30
      %v1886 = vsub.s32 %v1882, %v1885
      %vm1887 = vcmp.lt.s32.totalorder %v1886, 0
      %v1888 = vsub.s32 0, %v1886
      %v1889 = vsel %vm1887, %v1888, %v1886
      %v1890 = vclz %v1889
      %v1891 = vsub.s32 %v1890, 2
      %vm1892 = vcmp.gt.s32.totalorder 0, %v1891
      %v1893 = vsel %vm1892, 0, %v1891
      %v1894 = vsub.s32 32, %v1893
      %v1895 = vshll.u32 %v1886, %v1893
      %v1896 = vshrl.u32 %v1878, %v1894
      %v1897 = vor.u32 %v1895, %v1896
      %v1898 = vsub.s32 4294967266, %v1893
      %v1899 = vadd.s32 %v1898, 127
      %v1900 = vshll.u32 %v1899, 23
      %v1901 = vor.u32 4788187, %v1900
      %v1902 = vand.u32 2147483647, %v1901
      %v1904 = vcvt.s32.f32 %v1897
      %v1905 = vmul.f32 %v1904, %v1902
      %v1906 = vxor.u32 %v1905, 2147483648
      %v1907 = vsel %vm1824, %v1906, %v1905
      %v1908 = vsub.s32 4, %v1884
      %v1909 = vsel %vm1824, %v1908, %v1884
      %v1910 = vsel %vm1823, %v1808, %v1907
      %v1911 = vsel %vm1823, 0, %v1909
      %v1912 = vcosq.f32.pop %v1910
      %v1913 = vsinq.f32.pop %v1910
      %vm1914 = vweird.f32 %v1808
      %v1915 = vand.u32 %v1911, 3
      %vm1916 = vcmp.lt.s32.totalorder %v1915, 2
      %vm1917 = vcmp.eq.s32.totalorder %v1915, 0
      %v1918 = vxor.u32 %v1913, 2147483648
      %v1919 = vsel %vm1917, %v1912, %v1918
      %vm1920 = vcmp.eq.s32.totalorder %v1915, 2
      %v1921 = vxor.u32 %v1912, 2147483648
      %v1922 = vsel %vm1920, %v1921, %v1913
      %v1923 = vsel %vm1916, %v1919, %v1922
      %v1924 = vsel %vm1914, nan, %v1923
      %v1925 = vand.u32 2147483647, %v1809
      %vm1926 = vcmp.le.f32.partialorder %v1925, 0.7853982
      %vm1927 = vcmp.lt.s32.totalorder %v1809, 0
      %v1928 = vand.u32 %v1809, 2139095040
      %v1929 = vshrl.u32 %v1928, 23
      %v1930 = vsub.s32 %v1929, 127
      %v1931 = vand.u32 2147483647, %v1809
      %v1932 = vand.u32 %v1931, 8388607
      %v1933 = vor.u32 %v1932, 8388608
      %v1934 = vsub.s32 0, %v1933
      %v1935 = vadd.s32 %v1930, 1
      %vm1936 = vcmp.gt.s32.totalorder %v1935, 0
      %v1937 = vsel %vm1936, %v1935, 0
      %v1938 = vshrl.u32 %v1937, 5
      %v1939 = vand.u32 %v1937, 31
      %v1940 = vsub.s32 32, %v1939
      %v1941 = vshrl.u32 683565275, %v1940
      %v1942 = vshll.u32 683565275, %v1939
      %v1943 = vshrl.u32 2475754826, %v1940
      %v1944 = vor.u32 %v1942, %v1943
      %v1945 = vshll.u32 2475754826, %v1939
      %v1946 = vshrl.u32 2131351028, %v1940
      %v1947 = vor.u32 %v1945, %v1946
      %v1948 = vshll.u32 2131351028, %v1939
      %v1949 = vshrl.u32 2102212464, %v1940
      %v1950 = vor.u32 %v1948, %v1949
      %v1951 = vshll.u32 2102212464, %v1939
      %v1952 = vshrl.u32 920167782, %v1940
      %v1953 = vor.u32 %v1951, %v1952
      %v1954 = vshll.u32 920167782, %v1939
      %v1955 = vshrl.u32 1326507024, %v1940
      %v1956 = vor.u32 %v1954, %v1955
      %vm1957 = vcmp.lt.s32.totalorder %v1938, 1
      %vm1958 = vcmp.lt.s32.totalorder %v1938, 2
      %vm1959 = vcmp.lt.s32.totalorder %v1938, 3
      %vm1960 = vcmp.lt.s32.totalorder %v1938, 4
      %v1961 = vsel %vm1957, %v1941, %v1944
      %v1962 = vsel %vm1960, %v1950, 2102212464
      %v1963 = vsel %vm1959, %v1947, %v1962
      %v1964 = vsel %vm1958, %v1961, %v1963
      %v1965 = vsel %vm1957, %v1944, %v1947
      %v1966 = vsel %vm1960, %v1953, 920167782
      %v1967 = vsel %vm1959, %v1950, %v1966
      %v1968 = vsel %vm1958, %v1965, %v1967
      %v1969 = vsel %vm1957, %v1947, %v1950
      %v1970 = vsel %vm1960, %v1956, 1326507024
      %v1971 = vsel %vm1959, %v1953, %v1970
      %v1972 = vsel %vm1958, %v1969, %v1971
      %v1973 = vshll.u32 %v1933, 8
      %v1974 = vmul.u32.u64.compose %v1973, %v1972
      %v1975 = vextract.low.u32 %v1974
      %v1976 = vextract.high.u32 %v1974
      %v1977 = vmul.u32.u64.compose %v1973, %v1968
      %v1978 = vextract.low.u32 %v1977
      %v1979 = vextract.high.u32 %v1977
      %v1980 = vmul.u32 %v1973, %v1964
      %v1981 = vadd.s32 %v1976, %v1978
      %vm1982 = vc.u32 %v1976, %v1978
      %v1983 = vadd.s32 %v1979, 1
      %v1984 = vsel %vm1982, %v1983, %v1979
      %v1985 = vadd.s32 %v1980, %v1984
      %v1986 = vadd.s32 %v1985, 536870912
      %v1987 = vshrl.u32 %v1986, 30
      %v1988 = vshll.u32 %v1987, 30
      %v1989 = vsub.s32 %v1985, %v1988
      %vm1990 = vcmp.lt.s32.totalorder %v1989, 0
      %v1991 = vsub.s32 0, %v1989
      %v1992 = vsel %vm1990, %v1991, %v1989
      %v1993 = vclz %v1992
      %v1994 = vsub.s32 %v1993, 2
      %vm1995 = vcmp.gt.s32.totalorder 0, %v1994
      %v1996 = vsel %vm1995, 0, %v1994
      %v1997 = vsub.s32 32, %v1996
      %v1998 = vshll.u32 %v1989, %v1996
      %v1999 = vshrl.u32 %v1981, %v1997
      %v2000 = vor.u32 %v1998, %v1999
      %v2001 = vsub.s32 4294967266, %v1996
      %v2002 = vadd.s32 %v2001, 127
      %v2003 = vshll.u32 %v2002, 23
      %v2004 = vor.u32 4788187, %v2003
      %v2005 = vand.u32 2147483647, %v2004
      %v2007 = vcvt.s32.f32 %v2000
      %v2008 = vmul.f32 %v2007, %v2005
      %v2009 = vxor.u32 %v2008, 2147483648
      %v2010 = vsel %vm1927, %v2009, %v2008
      %v2011 = vsub.s32 4, %v1987
      %v2012 = vsel %vm1927, %v2011, %v1987
      %v2013 = vsel %vm1926, %v1809, %v2010
      %v2014 = vsel %vm1926, 0, %v2012
      %v2015 = vcosq.f32.pop %v2013
      %v2016 = vsinq.f32.pop %v2013
      %vm2017 = vweird.f32 %v1809
      %v2018 = vand.u32 %v2014, 3
      %vm2019 = vcmp.lt.s32.totalorder %v2018, 2
      %vm2020 = vcmp.eq.s32.totalorder %v2018, 0
      %v2021 = vxor.u32 %v2016, 2147483648
      %v2022 = vsel %vm2020, %v2015, %v2021
      %vm2023 = vcmp.eq.s32.totalorder %v2018, 2
      %v2024 = vxor.u32 %v2015, 2147483648
      %v2025 = vsel %vm2023, %v2024, %v2016
      %v2026 = vsel %vm2019, %v2022, %v2025
      %v2027 = vsel %vm2017, nan, %v2026
      %v2028 = vmul.f32 %v1819, %v1924
      %v2029 = vmul.f32 %v1821, %v2027
      %2030 = vset.pattern.permute.xlu0 104
      %2031 = vperm.xlu0 %2030, %v42
      %v2032 = vpop.permute.xlu0 %2031
      %v2034 = vmul.f32 %v2032, %v2028
      %v2035 = vmul.f32 %v2032, %v2029
      %v2036 = vadd.f32 %v1754, %v2034
      %v2037 = vadd.f32 %v1755, %v2035
      %2038 = vset.pattern.permute.xlu0 112
      %2039 = vperm.xlu0 %2038, %v42
      %v2040 = vpop.permute.xlu0 %2039
      %v2042 = vsub.f32 %v47, %v2040
      %v2043 = vsub.f32 %v51, %v2040
      %2044 = vset.pattern.permute.xlu0 113
      %2045 = vperm.xlu0 %2044, %v42
      %v2046 = vpop.permute.xlu0 %2045
      %v2048 = vsub.f32 %v65, %v2046
      %v2049 = vsub.f32 %v69, %v2046
      %2050 = vset.pattern.permute.xlu0 115
      %2051 = vperm.xlu0 %2050, %v42
      %v2052 = vpop.permute.xlu0 %2051
      %v2054 = vmul.f32 %v2048, %v2052
      %v2055 = vmul.f32 %v2049, %v2052
      %2056 = vset.pattern.permute.xlu0 114
      %2057 = vperm.xlu0 %2056, %v42
      %v2058 = vpop.permute.xlu0 %2057
      %v2060 = vmul.f32 %v2042, %v2058
      %v2061 = vmul.f32 %v2043, %v2058
      %v2062 = vadd.f32 %v2054, %v2060
      %v2063 = vadd.f32 %v2055, %v2061
      %2064 = vset.pattern.permute.xlu0 116
      %2065 = vperm.xlu0 %2064, %v42
      %v2066 = vpop.permute.xlu0 %2065
      %v2068 = vmul.f32 %v2048, %v2066
      %v2069 = vmul.f32 %v2049, %v2066
      %2070 = vset.pattern.permute.xlu0 117
      %2071 = vperm.xlu0 %2070, %v42
      %v2072 = vpop.permute.xlu0 %2071
      %v2074 = vmul.f32 %v2042, %v2072
      %v2075 = vmul.f32 %v2043, %v2072
      %v2076 = vsub.f32 %v2068, %v2074
      %v2077 = vsub.f32 %v2069, %v2075
      %2078 = vset.pattern.permute.xlu0 118
      %2079 = vperm.xlu0 %2078, %v42
      %v2080 = vpop.permute.xlu0 %2079
      %v2082 = vmul.f32 %v2048, %v2080
      %v2083 = vmul.f32 %v2049, %v2080
      %2084 = vset.pattern.permute.xlu0 119
      %2085 = vperm.xlu0 %2084, %v42
      %v2086 = vpop.permute.xlu0 %2085
      %v2088 = vmul.f32 %v2042, %v2086
      %v2089 = vmul.f32 %v2043, %v2086
      %v2090 = vsub.f32 %v2082, %v2088
      %v2091 = vsub.f32 %v2083, %v2089
      %v2092 = vmul.f32 %v2062, %v2062
      %v2093 = vmul.f32 %v2063, %v2063
      %v2094 = vmul.f32 %v2076, %v2076
      %v2095 = vmul.f32 %v2077, %v2077
      %v2096 = vadd.f32 %v2092, %v2094
      %v2097 = vadd.f32 %v2093, %v2095
      %v2098 = vmul.f32 %v2096, -0.5
      %v2099 = vmul.f32 %v2097, -0.5
      %v2100 = vmul.f32 %v2098, 1.442695
      %v2101 = vpow.pop %v2100
      %v2102 = vmul.f32 %v2099, 1.442695
      %v2103 = vpow.pop %v2102
      %v2104 = vand.u32 2147483647, %v2090
      %vm2105 = vcmp.le.f32.partialorder %v2104, 0.7853982
      %vm2106 = vcmp.lt.s32.totalorder %v2090, 0
      %v2107 = vand.u32 %v2090, 2139095040
      %v2108 = vshrl.u32 %v2107, 23
      %v2109 = vsub.s32 %v2108, 127
      %v2110 = vand.u32 2147483647, %v2090
      %v2111 = vand.u32 %v2110, 8388607
      %v2112 = vor.u32 %v2111, 8388608
      %v2113 = vsub.s32 0, %v2112
      %v2114 = vadd.s32 %v2109, 1
      %vm2115 = vcmp.gt.s32.totalorder %v2114, 0
      %v2116 = vsel %vm2115, %v2114, 0
      %v2117 = vshrl.u32 %v2116, 5
      %v2118 = vand.u32 %v2116, 31
      %v2119 = vsub.s32 32, %v2118
      %v2120 = vshrl.u32 683565275, %v2119
      %v2121 = vshll.u32 683565275, %v2118
      %v2122 = vshrl.u32 2475754826, %v2119
      %v2123 = vor.u32 %v2121, %v2122
      %v2124 = vshll.u32 2475754826, %v2118
      %v2125 = vshrl.u32 2131351028, %v2119
      %v2126 = vor.u32 %v2124, %v2125
      %v2127 = vshll.u32 2131351028, %v2118
      %v2128 = vshrl.u32 2102212464, %v2119
      %v2129 = vor.u32 %v2127, %v2128
      %v2130 = vshll.u32 2102212464, %v2118
      %v2131 = vshrl.u32 920167782, %v2119
      %v2132 = vor.u32 %v2130, %v2131
      %v2133 = vshll.u32 920167782, %v2118
      %v2134 = vshrl.u32 1326507024, %v2119
      %v2135 = vor.u32 %v2133, %v2134
      %vm2136 = vcmp.lt.s32.totalorder %v2117, 1
      %vm2137 = vcmp.lt.s32.totalorder %v2117, 2
      %vm2138 = vcmp.lt.s32.totalorder %v2117, 3
      %vm2139 = vcmp.lt.s32.totalorder %v2117, 4
      %v2140 = vsel %vm2136, %v2120, %v2123
      %v2141 = vsel %vm2139, %v2129, 2102212464
      %v2142 = vsel %vm2138, %v2126, %v2141
      %v2143 = vsel %vm2137, %v2140, %v2142
      %v2144 = vsel %vm2136, %v2123, %v2126
      %v2145 = vsel %vm2139, %v2132, 920167782
      %v2146 = vsel %vm2138, %v2129, %v2145
      %v2147 = vsel %vm2137, %v2144, %v2146
      %v2148 = vsel %vm2136, %v2126, %v2129
      %v2149 = vsel %vm2139, %v2135, 1326507024
      %v2150 = vsel %vm2138, %v2132, %v2149
      %v2151 = vsel %vm2137, %v2148, %v2150
      %v2152 = vshll.u32 %v2112, 8
      %v2153 = vmul.u32.u64.compose %v2152, %v2151
      %v2154 = vextract.low.u32 %v2153
      %v2155 = vextract.high.u32 %v2153
      %v2156 = vmul.u32.u64.compose %v2152, %v2147
      %v2157 = vextract.low.u32 %v2156
      %v2158 = vextract.high.u32 %v2156
      %v2159 = vmul.u32 %v2152, %v2143
      %v2160 = vadd.s32 %v2155, %v2157
      %vm2161 = vc.u32 %v2155, %v2157
      %v2162 = vadd.s32 %v2158, 1
      %v2163 = vsel %vm2161, %v2162, %v2158
      %v2164 = vadd.s32 %v2159, %v2163
      %v2165 = vadd.s32 %v2164, 536870912
      %v2166 = vshrl.u32 %v2165, 30
      %v2167 = vshll.u32 %v2166, 30
      %v2168 = vsub.s32 %v2164, %v2167
      %vm2169 = vcmp.lt.s32.totalorder %v2168, 0
      %v2170 = vsub.s32 0, %v2168
      %v2171 = vsel %vm2169, %v2170, %v2168
      %v2172 = vclz %v2171
      %v2173 = vsub.s32 %v2172, 2
      %vm2174 = vcmp.gt.s32.totalorder 0, %v2173
      %v2175 = vsel %vm2174, 0, %v2173
      %v2176 = vsub.s32 32, %v2175
      %v2177 = vshll.u32 %v2168, %v2175
      %v2178 = vshrl.u32 %v2160, %v2176
      %v2179 = vor.u32 %v2177, %v2178
      %v2180 = vsub.s32 4294967266, %v2175
      %v2181 = vadd.s32 %v2180, 127
      %v2182 = vshll.u32 %v2181, 23
      %v2183 = vor.u32 4788187, %v2182
      %v2184 = vand.u32 2147483647, %v2183
      %v2186 = vcvt.s32.f32 %v2179
      %v2187 = vmul.f32 %v2186, %v2184
      %v2188 = vxor.u32 %v2187, 2147483648
      %v2189 = vsel %vm2106, %v2188, %v2187
      %v2190 = vsub.s32 4, %v2166
      %v2191 = vsel %vm2106, %v2190, %v2166
      %v2192 = vsel %vm2105, %v2090, %v2189
      %v2193 = vsel %vm2105, 0, %v2191
      %v2194 = vcosq.f32.pop %v2192
      %v2195 = vsinq.f32.pop %v2192
      %vm2196 = vweird.f32 %v2090
      %v2197 = vand.u32 %v2193, 3
      %vm2198 = vcmp.lt.s32.totalorder %v2197, 2
      %vm2199 = vcmp.eq.s32.totalorder %v2197, 0
      %v2200 = vxor.u32 %v2195, 2147483648
      %v2201 = vsel %vm2199, %v2194, %v2200
      %vm2202 = vcmp.eq.s32.totalorder %v2197, 2
      %v2203 = vxor.u32 %v2194, 2147483648
      %v2204 = vsel %vm2202, %v2203, %v2195
      %v2205 = vsel %vm2198, %v2201, %v2204
      %v2206 = vsel %vm2196, nan, %v2205
      %v2207 = vand.u32 2147483647, %v2091
      %vm2208 = vcmp.le.f32.partialorder %v2207, 0.7853982
      %vm2209 = vcmp.lt.s32.totalorder %v2091, 0
      %v2210 = vand.u32 %v2091, 2139095040
      %v2211 = vshrl.u32 %v2210, 23
      %v2212 = vsub.s32 %v2211, 127
      %v2213 = vand.u32 2147483647, %v2091
      %v2214 = vand.u32 %v2213, 8388607
      %v2215 = vor.u32 %v2214, 8388608
      %v2216 = vsub.s32 0, %v2215
      %v2217 = vadd.s32 %v2212, 1
      %vm2218 = vcmp.gt.s32.totalorder %v2217, 0
      %v2219 = vsel %vm2218, %v2217, 0
      %v2220 = vshrl.u32 %v2219, 5
      %v2221 = vand.u32 %v2219, 31
      %v2222 = vsub.s32 32, %v2221
      %v2223 = vshrl.u32 683565275, %v2222
      %v2224 = vshll.u32 683565275, %v2221
      %v2225 = vshrl.u32 2475754826, %v2222
      %v2226 = vor.u32 %v2224, %v2225
      %v2227 = vshll.u32 2475754826, %v2221
      %v2228 = vshrl.u32 2131351028, %v2222
      %v2229 = vor.u32 %v2227, %v2228
      %v2230 = vshll.u32 2131351028, %v2221
      %v2231 = vshrl.u32 2102212464, %v2222
      %v2232 = vor.u32 %v2230, %v2231
      %v2233 = vshll.u32 2102212464, %v2221
      %v2234 = vshrl.u32 920167782, %v2222
      %v2235 = vor.u32 %v2233, %v2234
      %v2236 = vshll.u32 920167782, %v2221
      %v2237 = vshrl.u32 1326507024, %v2222
      %v2238 = vor.u32 %v2236, %v2237
      %vm2239 = vcmp.lt.s32.totalorder %v2220, 1
      %vm2240 = vcmp.lt.s32.totalorder %v2220, 2
      %vm2241 = vcmp.lt.s32.totalorder %v2220, 3
      %vm2242 = vcmp.lt.s32.totalorder %v2220, 4
      %v2243 = vsel %vm2239, %v2223, %v2226
      %v2244 = vsel %vm2242, %v2232, 2102212464
      %v2245 = vsel %vm2241, %v2229, %v2244
      %v2246 = vsel %vm2240, %v2243, %v2245
      %v2247 = vsel %vm2239, %v2226, %v2229
      %v2248 = vsel %vm2242, %v2235, 920167782
      %v2249 = vsel %vm2241, %v2232, %v2248
      %v2250 = vsel %vm2240, %v2247, %v2249
      %v2251 = vsel %vm2239, %v2229, %v2232
      %v2252 = vsel %vm2242, %v2238, 1326507024
      %v2253 = vsel %vm2241, %v2235, %v2252
      %v2254 = vsel %vm2240, %v2251, %v2253
      %v2255 = vshll.u32 %v2215, 8
      %v2256 = vmul.u32.u64.compose %v2255, %v2254
      %v2257 = vextract.low.u32 %v2256
      %v2258 = vextract.high.u32 %v2256
      %v2259 = vmul.u32.u64.compose %v2255, %v2250
      %v2260 = vextract.low.u32 %v2259
      %v2261 = vextract.high.u32 %v2259
      %v2262 = vmul.u32 %v2255, %v2246
      %v2263 = vadd.s32 %v2258, %v2260
      %vm2264 = vc.u32 %v2258, %v2260
      %v2265 = vadd.s32 %v2261, 1
      %v2266 = vsel %vm2264, %v2265, %v2261
      %v2267 = vadd.s32 %v2262, %v2266
      %v2268 = vadd.s32 %v2267, 536870912
      %v2269 = vshrl.u32 %v2268, 30
      %v2270 = vshll.u32 %v2269, 30
      %v2271 = vsub.s32 %v2267, %v2270
      %vm2272 = vcmp.lt.s32.totalorder %v2271, 0
      %v2273 = vsub.s32 0, %v2271
      %v2274 = vsel %vm2272, %v2273, %v2271
      %v2275 = vclz %v2274
      %v2276 = vsub.s32 %v2275, 2
      %vm2277 = vcmp.gt.s32.totalorder 0, %v2276
      %v2278 = vsel %vm2277, 0, %v2276
      %v2279 = vsub.s32 32, %v2278
      %v2280 = vshll.u32 %v2271, %v2278
      %v2281 = vshrl.u32 %v2263, %v2279
      %v2282 = vor.u32 %v2280, %v2281
      %v2283 = vsub.s32 4294967266, %v2278
      %v2284 = vadd.s32 %v2283, 127
      %v2285 = vshll.u32 %v2284, 23
      %v2286 = vor.u32 4788187, %v2285
      %v2287 = vand.u32 2147483647, %v2286
      %v2289 = vcvt.s32.f32 %v2282
      %v2290 = vmul.f32 %v2289, %v2287
      %v2291 = vxor.u32 %v2290, 2147483648
      %v2292 = vsel %vm2209, %v2291, %v2290
      %v2293 = vsub.s32 4, %v2269
      %v2294 = vsel %vm2209, %v2293, %v2269
      %v2295 = vsel %vm2208, %v2091, %v2292
      %v2296 = vsel %vm2208, 0, %v2294
      %v2297 = vcosq.f32.pop %v2295
      %v2298 = vsinq.f32.pop %v2295
      %vm2299 = vweird.f32 %v2091
      %v2300 = vand.u32 %v2296, 3
      %vm2301 = vcmp.lt.s32.totalorder %v2300, 2
      %vm2302 = vcmp.eq.s32.totalorder %v2300, 0
      %v2303 = vxor.u32 %v2298, 2147483648
      %v2304 = vsel %vm2302, %v2297, %v2303
      %vm2305 = vcmp.eq.s32.totalorder %v2300, 2
      %v2306 = vxor.u32 %v2297, 2147483648
      %v2307 = vsel %vm2305, %v2306, %v2298
      %v2308 = vsel %vm2301, %v2304, %v2307
      %v2309 = vsel %vm2299, nan, %v2308
      %v2310 = vmul.f32 %v2101, %v2206
      %v2311 = vmul.f32 %v2103, %v2309
      %2312 = vset.pattern.permute.xlu0 120
      %2313 = vperm.xlu0 %2312, %v42
      %v2314 = vpop.permute.xlu0 %2313
      %v2316 = vmul.f32 %v2314, %v2310
      %v2317 = vmul.f32 %v2314, %v2311
      %v2318 = vadd.f32 %v2036, %v2316
      %v2319 = vadd.f32 %v2037, %v2317
      %v2320 = vpack.c.bf16 %v2318, %v2318
      %v2321 = vpack.c.bf16 %v2319, %v2319
      %v2324 = vunpack.c.l.b16 %v2320
      %v2325 = vunpack.c.l.b16 %v2321
      %v2326 = vpack.c.b16 %v2325, %v2324
      %2328 = vst [vmem:[#allocation2] sm:$0xff] %v2326
    $region29: #{tpu_custom_call.1} parent=1 // pred_fallthru
      _
    %v2329 = vld [vmem:[#allocation2] sm:$0xff]
    %v2330 = vld [vmem:[#allocation3] sm:$0xf]
    %v2331 = vld [vmem:[#allocation3 + $0x4] sm:$0xf]
    %v2332 = vld [vmem:[#allocation3 + $0x8] sm:$0xf]
    %v2333 = vld [vmem:[#allocation3 + $0xc] sm:$0xf]
    %v2334 = vld [vmem:[#allocation3 + $0x10] sm:$0xf]
    %v2335 = vld [vmem:[#allocation3 + $0x14] sm:$0xf]
    %v2336 = vld [vmem:[#allocation3 + $0x18] sm:$0xf]
    %v2337 = vld [vmem:[#allocation3 + $0x1c] sm:$0xf]
    %v2338 = vld [vmem:[#allocation3 + $0x20] sm:$0xf]
    %v2339 = vld [vmem:[#allocation3 + $0x24] sm:$0xf]
    %v2340 = vld [vmem:[#allocation3 + $0x28] sm:$0xf]
    %v2341 = vld [vmem:[#allocation3 + $0x2c] sm:$0xf]
    %v2342 = vld [vmem:[#allocation3 + $0x30] sm:$0xf]
    %v2343 = vld [vmem:[#allocation3 + $0x34] sm:$0xf]
    %v2344 = vld [vmem:[#allocation3 + $0x38] sm:$0xf]
    %v2345 = vld [vmem:[#allocation3 + $0x3c] sm:$0xf]
    %v2346 = vld [vmem:[#allocation3 + $0x40] sm:$0xf]
    %v2347 = vld [vmem:[#allocation3 + $0x44] sm:$0xf]
    %v2348 = vld [vmem:[#allocation3 + $0x48] sm:$0xf]
    %v2349 = vld [vmem:[#allocation3 + $0x4c] sm:$0xf]
    %v2350 = vld [vmem:[#allocation3 + $0x50] sm:$0xf]
    %v2351 = vld [vmem:[#allocation3 + $0x54] sm:$0xf]
    %v2352 = vld [vmem:[#allocation3 + $0x58] sm:$0xf]
    %v2353 = vld [vmem:[#allocation3 + $0x5c] sm:$0xf]
    %v2354 = vld [vmem:[#allocation3 + $0x60] sm:$0xf]
    %v2355 = vld [vmem:[#allocation3 + $0x64] sm:$0xf]
    %v2356 = vld [vmem:[#allocation3 + $0x68] sm:$0xf]
    %v2357 = vld [vmem:[#allocation3 + $0x6c] sm:$0xf]
    %v2358 = vld [vmem:[#allocation3 + $0x70] sm:$0xf]
    %v2359 = vld [vmem:[#allocation3 + $0x74] sm:$0xf]
    %v2360 = vld [vmem:[#allocation3 + $0x78] sm:$0xf]
    %v2361 = vld [vmem:[#allocation3 + $0x7c] sm:$0xf]
    %v2362 = vld [vmem:[%s4] sm:$0xff]
    %2364 = vset.pattern.permute.xlu0 0
    %2365 = vperm.xlu0 %2364, %v2362
    %v2366 = vpop.permute.xlu0 %2365
    %v2369 = vunpack.c.l.b16 %v2329
    %v2370 = vunpack.c.h.b16 %v2329
    %v2371 = vpack.c.b16 %v2369, %v2369
    %v2372 = vpack.c.b16 %v2370, %v2370
    %v2407 = vunpack.c.l.b16 %v2330
    %v2408 = vunpack.c.l.b16 %v2331
    %v2409 = vunpack.c.l.b16 %v2332
    %v2410 = vunpack.c.l.b16 %v2333
    %v2411 = vunpack.c.l.b16 %v2334
    %v2412 = vunpack.c.l.b16 %v2335
    %v2413 = vunpack.c.l.b16 %v2336
    %v2414 = vunpack.c.l.b16 %v2337
    %v2415 = vunpack.c.l.b16 %v2338
    %v2416 = vunpack.c.l.b16 %v2339
    %v2417 = vunpack.c.l.b16 %v2340
    %v2418 = vunpack.c.l.b16 %v2341
    %v2419 = vunpack.c.l.b16 %v2342
    %v2420 = vunpack.c.l.b16 %v2343
    %v2421 = vunpack.c.l.b16 %v2344
    %v2422 = vunpack.c.l.b16 %v2345
    %v2423 = vunpack.c.l.b16 %v2346
    %v2424 = vunpack.c.l.b16 %v2347
    %v2425 = vunpack.c.l.b16 %v2348
    %v2426 = vunpack.c.l.b16 %v2349
    %v2427 = vunpack.c.l.b16 %v2350
    %v2428 = vunpack.c.l.b16 %v2351
    %v2429 = vunpack.c.l.b16 %v2352
    %v2430 = vunpack.c.l.b16 %v2353
    %v2431 = vunpack.c.l.b16 %v2354
    %v2432 = vunpack.c.l.b16 %v2355
    %v2433 = vunpack.c.l.b16 %v2356
    %v2434 = vunpack.c.l.b16 %v2357
    %v2435 = vunpack.c.l.b16 %v2358
    %v2436 = vunpack.c.l.b16 %v2359
    %v2437 = vunpack.c.l.b16 %v2360
    %v2438 = vunpack.c.l.b16 %v2361
    %v2439 = vpack.c.b16 %v2408, %v2407
    %v2440 = vpack.c.b16 %v2410, %v2409
    %v2441 = vpack.c.b16 %v2412, %v2411
    %v2442 = vpack.c.b16 %v2414, %v2413
    %v2443 = vpack.c.b16 %v2416, %v2415
    %v2444 = vpack.c.b16 %v2418, %v2417
    %v2445 = vpack.c.b16 %v2420, %v2419
    %v2446 = vpack.c.b16 %v2422, %v2421
    %v2447 = vpack.c.b16 %v2424, %v2423
    %v2448 = vpack.c.b16 %v2426, %v2425
    %v2449 = vpack.c.b16 %v2428, %v2427
    %v2450 = vpack.c.b16 %v2430, %v2429
    %v2451 = vpack.c.b16 %v2432, %v2431
    %v2452 = vpack.c.b16 %v2434, %v2433
    %v2453 = vpack.c.b16 %v2436, %v2435
    %v2454 = vpack.c.b16 %v2438, %v2437
    %2471 = vmatprep.subr.bf16.mxu0 0
    %2472 = vmatpush1.bf16.msra.mxu0 %v2446
    %2473 = vmatprep.subr.bf16.mxu0 0
    %2474 = vmatpush1.bf16.msra.mxu0 %v2445
    %2475 = vmatprep.subr.bf16.mxu0 0
    %2476 = vmatpush1.bf16.msra.mxu0 %v2444
    %2477 = vmatprep.subr.bf16.mxu0 0
    %2478 = vmatpush1.bf16.msra.mxu0 %v2443
    %2479 = vmatprep.subr.bf16.mxu0 0
    %2480 = vmatpush1.bf16.msra.mxu0 %v2442
    %2481 = vmatprep.subr.bf16.mxu0 0
    %2482 = vmatpush1.bf16.msra.mxu0 %v2441
    %2483 = vmatprep.subr.bf16.mxu0 0
    %2484 = vmatpush1.bf16.msra.mxu0 %v2440
    %2485 = vmatprep.subr.bf16.mxu0 0
    %2486 = vmatpush1.bf16.msra.mxu0 %v2439
    %2487 = vmatprep.subr.bf16.mxu0 0
    %2488 = vmatpush2.bf16.msra.mxu0 %v2454
    %2489 = vmatprep.subr.bf16.mxu0 0
    %2490 = vmatpush2.bf16.msra.mxu0 %v2453
    %2491 = vmatprep.subr.bf16.mxu0 0
    %2492 = vmatpush2.bf16.msra.mxu0 %v2452
    %2493 = vmatprep.subr.bf16.mxu0 0
    %2494 = vmatpush2.bf16.msra.mxu0 %v2451
    %2495 = vmatprep.subr.bf16.mxu0 0
    %2496 = vmatpush2.bf16.msra.mxu0 %v2450
    %2497 = vmatprep.subr.bf16.mxu0 0
    %2498 = vmatpush2.bf16.msra.mxu0 %v2449
    %2499 = vmatprep.subr.bf16.mxu0 0
    %2500 = vmatpush2.bf16.msra.mxu0 %v2448
    %2501 = vmatprep.subr.bf16.mxu0 0
    %2502 = vmatpush2.bf16.msra.mxu0 %v2447
    %2503 = vmatprep.mubr.bf16.mxu0 %v2372
    %2504 = vmatmul.mubr.bf16.gmra.mxu0 %v2371
    %v2505 = vpop.f32.mrf.mxu0
    %v2506 = vadd.f32 %v2366, %v2505
    %v2507 = vpop.f32.mrf.mxu0
    %v2508 = vpop.f32.mrf.mxu0
    %v2509 = vpop.f32.mrf.mxu0
    %2510 = vdwg.mxu0
    %2511 = vst [vmem:[#allocation6] sm:$0xff] %v2506
    // Predicated region
    $region30: #{tpu_custom_call.1} parent=1 // pred_check
      _
    $region31: #{tpu_custom_call.1} parent=1 // pred_check_branch
      %2513 = sbr.rel (0) target = $region33
    $region32: #{tpu_custom_call.1} parent=1 // pred_region
      %s2515 = ssub.s32 128, 128
      %2516 = vsyncadd [#allocation5], %s2515
      %s2518 = sshll.u32 [#allocation6], 4
      %s2519 = int_to_ptr.vmem [resolvable:$true] %s2518
      %2521 = dma.vmem_to_hbm [thread:$0]  %s2519, 128, %s5, [#allocation5]
    $region33: #{tpu_custom_call.1} parent=1 // pred_fallthru
      _
    // Predicated region
    $region34: #{tpu_custom_call.1} parent=1 // pred_check
      _
    $region35: #{tpu_custom_call.1} parent=1 // pred_check_branch
      %2523 = sbr.rel (0) target = $region37
    $region36: #{tpu_custom_call.1} parent=1 // pred_region
      %2524 = dma.done [#allocation5], 128
    $region37: #{tpu_custom_call.1} parent=1 // pred_fallthru
      _
    %2525 = vsyncpa [#allocation4], 1
    %2526 = vsyncpa [#allocation5], 1

</llo_original>
